<compile_context>
chip_gen: v6e
topology: v6e:2x2x1
jax: 0.10.0
libtpu: 0.0.40
codegen_flags: <defaults>
</compile_context>

<pallas_src>
import functools

import jax
import jax.numpy as jnp
import numpy as np
from jax.experimental import pallas as pl
from jax.experimental.pallas import tpu as pltpu

# 32 MiB scoped VMEM: raises v5e's 16 MiB default, matches v6e defaults and
# stays well under v7x's 64 MiB physical VMEM even with double buffering.
# (v5e/v6e could go to 64-96 MiB for bigger tiles; v7x should stay <= ~48 MiB.)
_VMEM_LIMIT_BYTES = 32 * 1024 * 1024


def _pick_row_tile(ho, target=8):
    """Largest divisor of ho that is <= target (output-row tile height)."""
    for t in range(min(target, ho), 0, -1):
        if ho % t == 0:
            return t
    return ho


# ----------------------------------------------------------------------------
# Fused kernel:  depthwise3x3+BN+PReLU  ->  1x1+BN+PReLU  (+ shortcut) (+ add)
#
#   grid = (N, Ho // th); one (image, row-tile) per step, channels on lanes.
#   x_ref:  (Hb, s, Wb, s*C)  padded input of image `n`, reshaped so every
#           strided tap is a contiguous slice.  Resident across the row axis.
#   wdw:    (3, 3, 1, C)   depthwise weights (BN scale folded in)
#   wpw:    (C, Cout)      pointwise weights (BN scale folded in)
#   wsc:    (C, Cout)      shortcut 1x1 weights (only when not identity)
#   o_ref:  (th, Wo, Cout) output row-tile.
# ----------------------------------------------------------------------------
def _fused_dwblock_kernel(*refs, stride, row_tile, out_w, cin, identity):
    if identity:
        (wdw, sdw, adw, wpw, spw, apw, x_ref, o_ref) = refs
        wsc = ssc = asc = None
    else:
        (wdw, sdw, adw, wpw, spw, apw, wsc, ssc, asc, x_ref, o_ref) = refs

    s = stride
    th = row_tile
    r0 = pl.program_id(1) * th              # first output row of this tile

    # ---- depthwise 3x3 conv (9 static taps) + folded BN + PReLU (VPU) ----
    acc = jnp.zeros((th, out_w, cin), jnp.float32)
    for di in range(3):
        qi, ri = di // s, di % s
        for dj in range(3):
            qj, rj = dj // s, dj % s
            tap = x_ref[pl.ds(r0 + qi, th), ri, qj:qj + out_w,
                        rj * cin:(rj + 1) * cin]
            acc = acc + wdw[di, dj] * tap    # (1,C) broadcast MAC
    y = acc + sdw[...]                       # folded BN shift
    y = jnp.where(y >= 0.0, y, adw[...] * y)  # PReLU

    # ---- pointwise 1x1 conv (MXU) + folded BN + PReLU ----
    y2d = y.reshape(th * out_w, cin)
    z = jnp.dot(y2d, wpw[...], preferred_element_type=jnp.float32)
    z = z + spw[...]
    z = jnp.where(z >= 0.0, z, apw[...] * z)

    # ---- shortcut: x[i*s, j*s] is exactly the center tap of the 3x3 window,
    #      already resident in the x VMEM block -> no extra HBM stream. ----
    qc, rc = 1 // s, 1 % s
    xs = x_ref[pl.ds(r0 + qc, th), rc, qc:qc + out_w, rc * cin:(rc + 1) * cin]
    xs2d = xs.reshape(th * out_w, cin)
    if identity:
        res = xs2d
    else:
        r = jnp.dot(xs2d, wsc[...], preferred_element_type=jnp.float32)
        r = r + ssc[...]
        res = jnp.where(r >= 0.0, r, asc[...] * r)

    cout = o_ref.shape[-1]
    o_ref[...] = (z + res).reshape(th, out_w, cout)


# ----------------------------------------------------------------------------
# DepthWiseBlock forward (single fused pallas_call)
# ----------------------------------------------------------------------------
def depthwise_block_forward(x_nchw, prm, stride):
    n, cin, h, w = x_nchw.shape
    cout = prm["pw_w"].shape[1]
    s = stride
    identity = (s == 1) and (cin == cout)

    # NCHW -> NHWC once at the block boundary (a full NHWC network would keep
    # activations in NHWC and skip these two transposes entirely).
    x_nhwc = jnp.transpose(x_nchw, (0, 2, 3, 1))

    ho = (h + 2 - 3) // s + 1
    wo = (w + 2 - 3) // s + 1
    ntap = -(-3 // s)                         # ceil(3/s) row/col block groups
    hb, wb = ho - 1 + ntap, wo - 1 + ntap
    hr, wr = s * hb, s * wb
    # Pad once in the wrapper: 1 at top/left, pad/crop bottom/right so the
    # padded extent is exactly (hr, wr), a multiple of the stride.
    xp = jnp.pad(x_nhwc, ((0, 0), (1, max(0, hr - h - 1)),
                          (1, max(0, wr - w - 1)), (0, 0)))
    xp = xp[:, :hr, :wr, :]
    xr = xp.reshape(n, hb, s, wb, s * cin)    # free, contiguous reshape

    th = _pick_row_tile(ho)                   # output-row tile (divides ho)
    n_ht = ho // th

    kernel = functools.partial(_fused_dwblock_kernel, stride=s, row_tile=th,
                               out_w=wo, cin=cin, identity=identity)

    in_specs = [
        pl.BlockSpec((3, 3, 1, cin), lambda i, j: (0, 0, 0, 0)),   # dw weights
        pl.BlockSpec((1, 1, cin), lambda i, j: (0, 0, 0)),         # dw shift
        pl.BlockSpec((1, 1, cin), lambda i, j: (0, 0, 0)),         # dw alpha
        pl.BlockSpec((cin, cout), lambda i, j: (0, 0)),            # pw weights
        pl.BlockSpec((1, cout), lambda i, j: (0, 0)),              # pw shift
        pl.BlockSpec((1, cout), lambda i, j: (0, 0)),              # pw alpha
    ]
    args = [
        prm["dw_w"].reshape(3, 3, 1, cin),
        prm["dw_shift"].reshape(1, 1, cin),
        prm["dw_alpha"].reshape(1, 1, cin),
        prm["pw_w"],
        prm["pw_shift"].reshape(1, cout),
        prm["pw_alpha"].reshape(1, cout),
    ]
    if not identity:
        in_specs += [
            pl.BlockSpec((cin, cout), lambda i, j: (0, 0)),        # sc weights
            pl.BlockSpec((1, cout), lambda i, j: (0, 0)),          # sc shift
            pl.BlockSpec((1, cout), lambda i, j: (0, 0)),          # sc alpha
        ]
        args += [
            prm["sc_w"],
            prm["sc_shift"].reshape(1, cout),
            prm["sc_alpha"].reshape(1, cout),
        ]
    # Padded image block: index_map is constant in the row-tile axis, so it is
    # fetched once per image and stays resident in VMEM across row tiles.
    in_specs += [pl.BlockSpec((None, hb, s, wb, s * cin),
                              lambda i, j: (i, 0, 0, 0, 0))]
    args += [xr]

    out_nhwc = pl.pallas_call(
        kernel,
        out_shape=jax.ShapeDtypeStruct((n, ho, wo, cout), jnp.float32),
        grid=(n, n_ht),
        in_specs=in_specs,
        out_specs=pl.BlockSpec((None, th, wo, cout), lambda i, j: (i, j, 0, 0)),
        compiler_params=pltpu.CompilerParams(
            dimension_semantics=("parallel", "parallel"),
            vmem_limit_bytes=_VMEM_LIMIT_BYTES),
    )(*args)

    return out_nhwc.transpose(0, 3, 1, 2)     # back to the module's NCHW


# ----------------------------------------------------------------------------
# Parameter preparation (fold BN scale into weights, NHWC weight layouts)
# ----------------------------------------------------------------------------
def prepare_params(p):
    cin = p["dw_w"].shape[0]
    cout = p["pw_w"].shape[0]
    q = {}
    q["dw_w"] = jnp.transpose(p["dw_w"].reshape(cin, 3, 3), (1, 2, 0)) * p["dw_scale"]
    q["dw_shift"] = p["dw_shift"]
    q["dw_alpha"] = p["dw_alpha"]
    q["pw_w"] = p["pw_w"].reshape(cout, cin).T * p["pw_scale"][None, :]
    q["pw_shift"] = p["pw_shift"]
    q["pw_alpha"] = p["pw_alpha"]
    q["sc_w"] = p["sc_w"].reshape(cout, cin).T * p["sc_scale"][None, :]
    q["sc_shift"] = p["sc_shift"]
    q["sc_alpha"] = p["sc_alpha"]
    return q


# ----------------------------------------------------------------------------
# Pure-JAX reference (for verification)
# ----------------------------------------------------------------------------
def conv_block_ref(x, w, scale, shift, alpha, stride, padding, groups):
    y = jax.lax.conv_general_dilated(
        x, w, window_strides=(stride, stride),
        padding=[(padding, padding), (padding, padding)],
        dimension_numbers=("NCHW", "OIHW", "NCHW"),
        feature_group_count=groups)
    y = y * scale[None, :, None, None] + shift[None, :, None, None]
    return jnp.where(y >= 0.0, y, alpha[None, :, None, None] * y)


def depthwise_block_ref(x, p, stride, cin, cout):
    h = conv_block_ref(x, p["dw_w"], p["dw_scale"], p["dw_shift"],
                       p["dw_alpha"], stride, 1, cin)
    h = conv_block_ref(h, p["pw_w"], p["pw_scale"], p["pw_shift"],
                       p["pw_alpha"], 1, 0, 1)
    if stride == 1 and cin == cout:
        s = x
    else:
        s = conv_block_ref(x, p["sc_w"], p["sc_scale"], p["sc_shift"],
                           p["sc_alpha"], stride, 0, 1)
    return h + s


# ----------------------------------------------------------------------------
# Deterministic parameter init (BN eval stats folded to scale/shift)
# ----------------------------------------------------------------------------
def _bn_fold(keys, c):
    gamma = 1.0 + 0.1 * jax.random.normal(keys[0], (c,), jnp.float32)
    beta = 0.1 * jax.random.normal(keys[1], (c,), jnp.float32)
    mean = 0.1 * jax.random.normal(keys[2], (c,), jnp.float32)
    var = jnp.abs(1.0 + 0.1 * jax.random.normal(keys[3], (c,), jnp.float32))
    scale = gamma / jnp.sqrt(var + 1e-5)
    shift = beta - mean * scale
    return scale, shift


def init_params(key, cin, cout):
    ks = jax.random.split(key, 20)
    p = {}
    # depthwise 3x3 ConvBlock (groups=cin) -> torch weight shape (cin, 1, 3, 3)
    p["dw_w"] = 0.2 * jax.random.normal(ks[0], (cin, 1, 3, 3), jnp.float32)
    p["dw_scale"], p["dw_shift"] = _bn_fold(ks[1:5], cin)
    p["dw_alpha"] = 0.25 + 0.05 * jax.random.normal(ks[5], (cin,), jnp.float32)
    # pointwise 1x1 ConvBlock -> (cout, cin, 1, 1)
    p["pw_w"] = 0.2 * jax.random.normal(ks[6], (cout, cin, 1, 1), jnp.float32)
    p["pw_scale"], p["pw_shift"] = _bn_fold(ks[7:11], cout)
    p["pw_alpha"] = 0.25 + 0.05 * jax.random.normal(ks[11], (cout,), jnp.float32)
    # shortcut 1x1 ConvBlock (only used when stride != 1 or cin != cout)
    p["sc_w"] = 0.2 * jax.random.normal(ks[12], (cout, cin, 1, 1), jnp.float32)
    p["sc_scale"], p["sc_shift"] = _bn_fold(ks[13:17], cout)
    p["sc_alpha"] = 0.25 + 0.05 * jax.random.normal(ks[17], (cout,), jnp.float32)
    return p


if __name__ == "__main__":
    key = jax.random.PRNGKey(0)
    kx1, kx2, kp1, kp2 = jax.random.split(key, 4)
    fwd = jax.jit(depthwise_block_forward, static_argnums=2)

    # Config A: stride=1, cin == cout -> identity shortcut (fused residual add)
    n, cin, cout, hh, ww, stride = 2, 8, 8, 16, 16, 1
    x = jax.random.normal(kx1, (n, cin, hh, ww), jnp.float32)
    raw = init_params(kp1, cin, cout)
    out = jax.block_until_ready(fwd(x, prepare_params(raw), stride))
    ref = depthwise_block_ref(x, raw, stride, cin, cout)
    np.testing.assert_allclose(np.asarray(out), np.asarray(ref),
                               rtol=1e-3, atol=1e-3)

    # Config B: stride=2, cin != cout -> fused main + 1x1-conv shortcut
    n, cin, cout, hh, ww, stride = 2, 8, 16, 16, 16, 2
    x2 = jax.random.normal(kx2, (n, cin, hh, ww), jnp.float32)
    raw2 = init_params(kp2, cin, cout)
    out2 = jax.block_until_ready(fwd(x2, prepare_params(raw2), stride))
    ref2 = depthwise_block_ref(x2, raw2, stride, cin, cout)
    np.testing.assert_allclose(np.asarray(out2), np.asarray(ref2),
                               rtol=1e-3, atol=1e-3)

    print("KERNEL_OK")
</pallas_src>

<mosaic_0001>
module attributes {stable_mosaic.version = 11 : i64} {
  func.func @_fused_dwblock_kernel(%arg0: i32, %arg1: i32, %arg2: memref<3x3x1x8xf32, #tpu.memory_space<vmem>>, %arg3: memref<1x1x8xf32, #tpu.memory_space<vmem>>, %arg4: memref<1x1x8xf32, #tpu.memory_space<vmem>>, %arg5: memref<8x8xf32, #tpu.memory_space<vmem>>, %arg6: memref<1x8xf32, #tpu.memory_space<vmem>>, %arg7: memref<1x8xf32, #tpu.memory_space<vmem>>, %arg8: memref<1x18x1x18x8xf32, #tpu.memory_space<vmem>>, %arg9: memref<1x8x16x8xf32, #tpu.memory_space<vmem>>) attributes {dimension_semantics = [#tpu.dimension_semantics<parallel>, #tpu.dimension_semantics<parallel>], iteration_bounds = array<i64: 2, 2>, scalar_prefetch = 0 : i64, scratch_operands = 0 : i64, tpu.core_type = #tpu.core_type<tc>, window_params = [{pipeline_mode = #tpu.pipeline_mode<synchronous>, transform_indices = @transform_0, window_bounds = array<i64: 3, 3, 1, 8>}, {pipeline_mode = #tpu.pipeline_mode<synchronous>, transform_indices = @transform_1, window_bounds = array<i64: 1, 1, 8>}, {pipeline_mode = #tpu.pipeline_mode<synchronous>, transform_indices = @transform_2, window_bounds = array<i64: 1, 1, 8>}, {pipeline_mode = #tpu.pipeline_mode<synchronous>, transform_indices = @transform_3, window_bounds = array<i64: 8, 8>}, {pipeline_mode = #tpu.pipeline_mode<synchronous>, transform_indices = @transform_4, window_bounds = array<i64: 1, 8>}, {pipeline_mode = #tpu.pipeline_mode<synchronous>, transform_indices = @transform_5, window_bounds = array<i64: 1, 8>}, {transform_indices = @transform_6, window_bounds = array<i64: 1, 18, 1, 18, 8>}, {transform_indices = @transform_7, window_bounds = array<i64: 1, 8, 16, 8>}]} {
    %c8_i32 = arith.constant 8 : i32
    %0 = arith.muli %arg1, %c8_i32 : i32
    %cst = arith.constant 0.000000e+00 : f32
    %1 = vector.broadcast %cst : f32 to vector<8x16x8xf32>
    %c0_i32 = arith.constant 0 : i32
    %2 = arith.addi %0, %c0_i32 : i32
    %c0 = arith.constant 0 : index
    %3 = arith.index_cast %2 : i32 to index
    %c0_0 = arith.constant 0 : index
    %c0_1 = arith.constant 0 : index
    %c0_2 = arith.constant 0 : index
    %4 = vector.load %arg8[%c0, %3, %c0_0, %c0_1, %c0_2] : memref<1x18x1x18x8xf32, #tpu.memory_space<vmem>>, vector<1x8x1x16x8xf32>
    %5 = vector.shape_cast %4 : vector<1x8x1x16x8xf32> to vector<8x16x8xf32>
    %c0_3 = arith.constant 0 : index
    %c0_4 = arith.constant 0 : index
    %c0_5 = arith.constant 0 : index
    %c0_6 = arith.constant 0 : index
    %6 = vector.load %arg2[%c0_3, %c0_4, %c0_5, %c0_6] : memref<3x3x1x8xf32, #tpu.memory_space<vmem>>, vector<1x1x1x8xf32>
    %7 = vector.shape_cast %6 : vector<1x1x1x8xf32> to vector<1x8xf32>
    %8 = vector.shape_cast %7 : vector<1x8xf32> to vector<1x1x8xf32>
    %9 = vector.broadcast %8 : vector<1x1x8xf32> to vector<8x16x8xf32>
    %10 = arith.mulf %9, %5 : vector<8x16x8xf32>
    %11 = arith.addf %1, %10 : vector<8x16x8xf32>
    %c0_i32_7 = arith.constant 0 : i32
    %12 = arith.addi %0, %c0_i32_7 : i32
    %c0_8 = arith.constant 0 : index
    %13 = arith.index_cast %12 : i32 to index
    %c0_9 = arith.constant 0 : index
    %c1 = arith.constant 1 : index
    %c0_10 = arith.constant 0 : index
    %14 = vector.load %arg8[%c0_8, %13, %c0_9, %c1, %c0_10] : memref<1x18x1x18x8xf32, #tpu.memory_space<vmem>>, vector<1x8x1x16x8xf32>
    %15 = vector.shape_cast %14 : vector<1x8x1x16x8xf32> to vector<8x16x8xf32>
    %c0_11 = arith.constant 0 : index
    %c1_12 = arith.constant 1 : index
    %c0_13 = arith.constant 0 : index
    %c0_14 = arith.constant 0 : index
    %16 = vector.load %arg2[%c0_11, %c1_12, %c0_13, %c0_14] : memref<3x3x1x8xf32, #tpu.memory_space<vmem>>, vector<1x1x1x8xf32>
    %17 = vector.shape_cast %16 : vector<1x1x1x8xf32> to vector<1x8xf32>
    %18 = vector.shape_cast %17 : vector<1x8xf32> to vector<1x1x8xf32>
    %19 = vector.broadcast %18 : vector<1x1x8xf32> to vector<8x16x8xf32>
    %20 = arith.mulf %19, %15 : vector<8x16x8xf32>
    %21 = arith.addf %11, %20 : vector<8x16x8xf32>
    %c0_i32_15 = arith.constant 0 : i32
    %22 = arith.addi %0, %c0_i32_15 : i32
    %c0_16 = arith.constant 0 : index
    %23 = arith.index_cast %22 : i32 to index
    %c0_17 = arith.constant 0 : index
    %c2 = arith.constant 2 : index
    %c0_18 = arith.constant 0 : index
    %24 = vector.load %arg8[%c0_16, %23, %c0_17, %c2, %c0_18] : memref<1x18x1x18x8xf32, #tpu.memory_space<vmem>>, vector<1x8x1x16x8xf32>
    %25 = vector.shape_cast %24 : vector<1x8x1x16x8xf32> to vector<8x16x8xf32>
    %c0_19 = arith.constant 0 : index
    %c2_20 = arith.constant 2 : index
    %c0_21 = arith.constant 0 : index
    %c0_22 = arith.constant 0 : index
    %26 = vector.load %arg2[%c0_19, %c2_20, %c0_21, %c0_22] : memref<3x3x1x8xf32, #tpu.memory_space<vmem>>, vector<1x1x1x8xf32>
    %27 = vector.shape_cast %26 : vector<1x1x1x8xf32> to vector<1x8xf32>
    %28 = vector.shape_cast %27 : vector<1x8xf32> to vector<1x1x8xf32>
    %29 = vector.broadcast %28 : vector<1x1x8xf32> to vector<8x16x8xf32>
    %30 = arith.mulf %29, %25 : vector<8x16x8xf32>
    %31 = arith.addf %21, %30 : vector<8x16x8xf32>
    %c1_i32 = arith.constant 1 : i32
    %32 = arith.addi %0, %c1_i32 : i32
    %c0_23 = arith.constant 0 : index
    %33 = arith.index_cast %32 : i32 to index
    %c0_24 = arith.constant 0 : index
    %c0_25 = arith.constant 0 : index
    %c0_26 = arith.constant 0 : index
    %34 = vector.load %arg8[%c0_23, %33, %c0_24, %c0_25, %c0_26] : memref<1x18x1x18x8xf32, #tpu.memory_space<vmem>>, vector<1x8x1x16x8xf32>
    %35 = vector.shape_cast %34 : vector<1x8x1x16x8xf32> to vector<8x16x8xf32>
    %c1_27 = arith.constant 1 : index
    %c0_28 = arith.constant 0 : index
    %c0_29 = arith.constant 0 : index
    %c0_30 = arith.constant 0 : index
    %36 = vector.load %arg2[%c1_27, %c0_28, %c0_29, %c0_30] : memref<3x3x1x8xf32, #tpu.memory_space<vmem>>, vector<1x1x1x8xf32>
    %37 = vector.shape_cast %36 : vector<1x1x1x8xf32> to vector<1x8xf32>
    %38 = vector.shape_cast %37 : vector<1x8xf32> to vector<1x1x8xf32>
    %39 = vector.broadcast %38 : vector<1x1x8xf32> to vector<8x16x8xf32>
    %40 = arith.mulf %39, %35 : vector<8x16x8xf32>
    %41 = arith.addf %31, %40 : vector<8x16x8xf32>
    %c1_i32_31 = arith.constant 1 : i32
    %42 = arith.addi %0, %c1_i32_31 : i32
    %c0_32 = arith.constant 0 : index
    %43 = arith.index_cast %42 : i32 to index
    %c0_33 = arith.constant 0 : index
    %c1_34 = arith.constant 1 : index
    %c0_35 = arith.constant 0 : index
    %44 = vector.load %arg8[%c0_32, %43, %c0_33, %c1_34, %c0_35] : memref<1x18x1x18x8xf32, #tpu.memory_space<vmem>>, vector<1x8x1x16x8xf32>
    %45 = vector.shape_cast %44 : vector<1x8x1x16x8xf32> to vector<8x16x8xf32>
    %c1_36 = arith.constant 1 : index
    %c1_37 = arith.constant 1 : index
    %c0_38 = arith.constant 0 : index
    %c0_39 = arith.constant 0 : index
    %46 = vector.load %arg2[%c1_36, %c1_37, %c0_38, %c0_39] : memref<3x3x1x8xf32, #tpu.memory_space<vmem>>, vector<1x1x1x8xf32>
    %47 = vector.shape_cast %46 : vector<1x1x1x8xf32> to vector<1x8xf32>
    %48 = vector.shape_cast %47 : vector<1x8xf32> to vector<1x1x8xf32>
    %49 = vector.broadcast %48 : vector<1x1x8xf32> to vector<8x16x8xf32>
    %50 = arith.mulf %49, %45 : vector<8x16x8xf32>
    %51 = arith.addf %41, %50 : vector<8x16x8xf32>
    %c1_i32_40 = arith.constant 1 : i32
    %52 = arith.addi %0, %c1_i32_40 : i32
    %c0_41 = arith.constant 0 : index
    %53 = arith.index_cast %52 : i32 to index
    %c0_42 = arith.constant 0 : index
    %c2_43 = arith.constant 2 : index
    %c0_44 = arith.constant 0 : index
    %54 = vector.load %arg8[%c0_41, %53, %c0_42, %c2_43, %c0_44] : memref<1x18x1x18x8xf32, #tpu.memory_space<vmem>>, vector<1x8x1x16x8xf32>
    %55 = vector.shape_cast %54 : vector<1x8x1x16x8xf32> to vector<8x16x8xf32>
    %c1_45 = arith.constant 1 : index
    %c2_46 = arith.constant 2 : index
    %c0_47 = arith.constant 0 : index
    %c0_48 = arith.constant 0 : index
    %56 = vector.load %arg2[%c1_45, %c2_46, %c0_47, %c0_48] : memref<3x3x1x8xf32, #tpu.memory_space<vmem>>, vector<1x1x1x8xf32>
    %57 = vector.shape_cast %56 : vector<1x1x1x8xf32> to vector<1x8xf32>
    %58 = vector.shape_cast %57 : vector<1x8xf32> to vector<1x1x8xf32>
    %59 = vector.broadcast %58 : vector<1x1x8xf32> to vector<8x16x8xf32>
    %60 = arith.mulf %59, %55 : vector<8x16x8xf32>
    %61 = arith.addf %51, %60 : vector<8x16x8xf32>
    %c2_i32 = arith.constant 2 : i32
    %62 = arith.addi %0, %c2_i32 : i32
    %c0_49 = arith.constant 0 : index
    %63 = arith.index_cast %62 : i32 to index
    %c0_50 = arith.constant 0 : index
    %c0_51 = arith.constant 0 : index
    %c0_52 = arith.constant 0 : index
    %64 = vector.load %arg8[%c0_49, %63, %c0_50, %c0_51, %c0_52] : memref<1x18x1x18x8xf32, #tpu.memory_space<vmem>>, vector<1x8x1x16x8xf32>
    %65 = vector.shape_cast %64 : vector<1x8x1x16x8xf32> to vector<8x16x8xf32>
    %c2_53 = arith.constant 2 : index
    %c0_54 = arith.constant 0 : index
    %c0_55 = arith.constant 0 : index
    %c0_56 = arith.constant 0 : index
    %66 = vector.load %arg2[%c2_53, %c0_54, %c0_55, %c0_56] : memref<3x3x1x8xf32, #tpu.memory_space<vmem>>, vector<1x1x1x8xf32>
    %67 = vector.shape_cast %66 : vector<1x1x1x8xf32> to vector<1x8xf32>
    %68 = vector.shape_cast %67 : vector<1x8xf32> to vector<1x1x8xf32>
    %69 = vector.broadcast %68 : vector<1x1x8xf32> to vector<8x16x8xf32>
    %70 = arith.mulf %69, %65 : vector<8x16x8xf32>
    %71 = arith.addf %61, %70 : vector<8x16x8xf32>
    %c2_i32_57 = arith.constant 2 : i32
    %72 = arith.addi %0, %c2_i32_57 : i32
    %c0_58 = arith.constant 0 : index
    %73 = arith.index_cast %72 : i32 to index
    %c0_59 = arith.constant 0 : index
    %c1_60 = arith.constant 1 : index
    %c0_61 = arith.constant 0 : index
    %74 = vector.load %arg8[%c0_58, %73, %c0_59, %c1_60, %c0_61] : memref<1x18x1x18x8xf32, #tpu.memory_space<vmem>>, vector<1x8x1x16x8xf32>
    %75 = vector.shape_cast %74 : vector<1x8x1x16x8xf32> to vector<8x16x8xf32>
    %c2_62 = arith.constant 2 : index
    %c1_63 = arith.constant 1 : index
    %c0_64 = arith.constant 0 : index
    %c0_65 = arith.constant 0 : index
    %76 = vector.load %arg2[%c2_62, %c1_63, %c0_64, %c0_65] : memref<3x3x1x8xf32, #tpu.memory_space<vmem>>, vector<1x1x1x8xf32>
    %77 = vector.shape_cast %76 : vector<1x1x1x8xf32> to vector<1x8xf32>
    %78 = vector.shape_cast %77 : vector<1x8xf32> to vector<1x1x8xf32>
    %79 = vector.broadcast %78 : vector<1x1x8xf32> to vector<8x16x8xf32>
    %80 = arith.mulf %79, %75 : vector<8x16x8xf32>
    %81 = arith.addf %71, %80 : vector<8x16x8xf32>
    %c2_i32_66 = arith.constant 2 : i32
    %82 = arith.addi %0, %c2_i32_66 : i32
    %c0_67 = arith.constant 0 : index
    %83 = arith.index_cast %82 : i32 to index
    %c0_68 = arith.constant 0 : index
    %c2_69 = arith.constant 2 : index
    %c0_70 = arith.constant 0 : index
    %84 = vector.load %arg8[%c0_67, %83, %c0_68, %c2_69, %c0_70] : memref<1x18x1x18x8xf32, #tpu.memory_space<vmem>>, vector<1x8x1x16x8xf32>
    %85 = vector.shape_cast %84 : vector<1x8x1x16x8xf32> to vector<8x16x8xf32>
    %c2_71 = arith.constant 2 : index
    %c2_72 = arith.constant 2 : index
    %c0_73 = arith.constant 0 : index
    %c0_74 = arith.constant 0 : index
    %86 = vector.load %arg2[%c2_71, %c2_72, %c0_73, %c0_74] : memref<3x3x1x8xf32, #tpu.memory_space<vmem>>, vector<1x1x1x8xf32>
    %87 = vector.shape_cast %86 : vector<1x1x1x8xf32> to vector<1x8xf32>
    %88 = vector.shape_cast %87 : vector<1x8xf32> to vector<1x1x8xf32>
    %89 = vector.broadcast %88 : vector<1x1x8xf32> to vector<8x16x8xf32>
    %90 = arith.mulf %89, %85 : vector<8x16x8xf32>
    %91 = arith.addf %81, %90 : vector<8x16x8xf32>
    %c0_75 = arith.constant 0 : index
    %c0_76 = arith.constant 0 : index
    %c0_77 = arith.constant 0 : index
    %92 = vector.load %arg3[%c0_75, %c0_76, %c0_77] : memref<1x1x8xf32, #tpu.memory_space<vmem>>, vector<1x1x8xf32>
    %93 = vector.broadcast %92 : vector<1x1x8xf32> to vector<8x16x8xf32>
    %94 = arith.addf %91, %93 : vector<8x16x8xf32>
    %cst_78 = arith.constant 0.000000e+00 : f32
    %95 = vector.broadcast %cst_78 : f32 to vector<8x16x8xf32>
    %96 = arith.cmpf oge, %94, %95 : vector<8x16x8xf32>
    %c0_79 = arith.constant 0 : index
    %c0_80 = arith.constant 0 : index
    %c0_81 = arith.constant 0 : index
    %97 = vector.load %arg4[%c0_79, %c0_80, %c0_81] : memref<1x1x8xf32, #tpu.memory_space<vmem>>, vector<1x1x8xf32>
    %98 = vector.broadcast %97 : vector<1x1x8xf32> to vector<8x16x8xf32>
    %99 = arith.mulf %98, %94 : vector<8x16x8xf32>
    %100 = arith.select %96, %94, %99 : vector<8x16x8xi1>, vector<8x16x8xf32>
    %101 = vector.shape_cast %100 : vector<8x16x8xf32> to vector<128x8xf32>
    %c0_82 = arith.constant 0 : index
    %c0_83 = arith.constant 0 : index
    %102 = vector.load %arg5[%c0_82, %c0_83] : memref<8x8xf32, #tpu.memory_space<vmem>>, vector<8x8xf32>
    %cst_84 = arith.constant dense<0.000000e+00> : vector<128x8xf32>
    %103 = tpu.matmul %101, %102, %cst_84 {dimension_numbers = #tpu.dot_dimension_numbers<[1], [0], [0], [1], [0, 0, 1, 1], [], []>} : vector<128x8xf32>, vector<8x8xf32>, vector<128x8xf32> -> vector<128x8xf32>
    %c0_85 = arith.constant 0 : index
    %c0_86 = arith.constant 0 : index
    %104 = vector.load %arg6[%c0_85, %c0_86] : memref<1x8xf32, #tpu.memory_space<vmem>>, vector<1x8xf32>
    %105 = vector.broadcast %104 : vector<1x8xf32> to vector<128x8xf32>
    %106 = arith.addf %103, %105 : vector<128x8xf32>
    %cst_87 = arith.constant 0.000000e+00 : f32
    %107 = vector.broadcast %cst_87 : f32 to vector<128x8xf32>
    %108 = arith.cmpf oge, %106, %107 : vector<128x8xf32>
    %c0_88 = arith.constant 0 : index
    %c0_89 = arith.constant 0 : index
    %109 = vector.load %arg7[%c0_88, %c0_89] : memref<1x8xf32, #tpu.memory_space<vmem>>, vector<1x8xf32>
    %110 = vector.broadcast %109 : vector<1x8xf32> to vector<128x8xf32>
    %111 = arith.mulf %110, %106 : vector<128x8xf32>
    %112 = arith.select %108, %106, %111 : vector<128x8xi1>, vector<128x8xf32>
    %c1_i32_90 = arith.constant 1 : i32
    %113 = arith.addi %0, %c1_i32_90 : i32
    %c0_91 = arith.constant 0 : index
    %114 = arith.index_cast %113 : i32 to index
    %c0_92 = arith.constant 0 : index
    %c1_93 = arith.constant 1 : index
    %c0_94 = arith.constant 0 : index
    %115 = vector.load %arg8[%c0_91, %114, %c0_92, %c1_93, %c0_94] : memref<1x18x1x18x8xf32, #tpu.memory_space<vmem>>, vector<1x8x1x16x8xf32>
    %116 = vector.shape_cast %115 : vector<1x8x1x16x8xf32> to vector<8x16x8xf32>
    %117 = vector.shape_cast %116 : vector<8x16x8xf32> to vector<128x8xf32>
    %118 = arith.addf %112, %117 : vector<128x8xf32>
    %119 = vector.shape_cast %118 : vector<128x8xf32> to vector<8x16x8xf32>
    %c0_95 = arith.constant 0 : index
    %c0_96 = arith.constant 0 : index
    %c0_97 = arith.constant 0 : index
    %c0_98 = arith.constant 0 : index
    %120 = vector.load %arg9[%c0_95, %c0_96, %c0_97, %c0_98] : memref<1x8x16x8xf32, #tpu.memory_space<vmem>>, vector<1x8x16x8xf32>
    %121 = vector.shape_cast %120 : vector<1x8x16x8xf32> to vector<8x16x8xf32>
    %122 = vector.shape_cast %119 : vector<8x16x8xf32> to vector<1x8x16x8xf32>
    tpu.vector_store %arg9[%c0_95, %c0_96, %c0_97, %c0_98], %122 {strides = array<i32>} : memref<1x8x16x8xf32, #tpu.memory_space<vmem>>, vector<1x8x16x8xf32>,
    return
  }
  func.func @transform_0(%arg0: i32, %arg1: i32) -> (i32, i32, i32, i32) {
    %c0_i32 = arith.constant 0 : i32
    %c0_i32_0 = arith.constant 0 : i32
    %c0_i32_1 = arith.constant 0 : i32
    %c0_i32_2 = arith.constant 0 : i32
    %c0_i32_3 = arith.constant 0 : i32
    return %c0_i32, %c0_i32_0, %c0_i32_1, %c0_i32_2 : i32, i32, i32, i32
  }
  func.func @transform_1(%arg0: i32, %arg1: i32) -> (i32, i32, i32) {
    %c0_i32 = arith.constant 0 : i32
    %c0_i32_0 = arith.constant 0 : i32
    %c0_i32_1 = arith.constant 0 : i32
    %c0_i32_2 = arith.constant 0 : i32
    return %c0_i32, %c0_i32_0, %c0_i32_1 : i32, i32, i32
  }
  func.func @transform_2(%arg0: i32, %arg1: i32) -> (i32, i32, i32) {
    %c0_i32 = arith.constant 0 : i32
    %c0_i32_0 = arith.constant 0 : i32
    %c0_i32_1 = arith.constant 0 : i32
    %c0_i32_2 = arith.constant 0 : i32
    return %c0_i32, %c0_i32_0, %c0_i32_1 : i32, i32, i32
  }
  func.func @transform_3(%arg0: i32, %arg1: i32) -> (i32, i32) {
    %c0_i32 = arith.constant 0 : i32
    %c0_i32_0 = arith.constant 0 : i32
    %c0_i32_1 = arith.constant 0 : i32
    return %c0_i32, %c0_i32_0 : i32, i32
  }
  func.func @transform_4(%arg0: i32, %arg1: i32) -> (i32, i32) {
    %c0_i32 = arith.constant 0 : i32
    %c0_i32_0 = arith.constant 0 : i32
    %c0_i32_1 = arith.constant 0 : i32
    return %c0_i32, %c0_i32_0 : i32, i32
  }
  func.func @transform_5(%arg0: i32, %arg1: i32) -> (i32, i32) {
    %c0_i32 = arith.constant 0 : i32
    %c0_i32_0 = arith.constant 0 : i32
    %c0_i32_1 = arith.constant 0 : i32
    return %c0_i32, %c0_i32_0 : i32, i32
  }
  func.func @transform_6(%arg0: i32, %arg1: i32) -> (i32, i32, i32, i32, i32) {
    %c0_i32 = arith.constant 0 : i32
    %c0_i32_0 = arith.constant 0 : i32
    %c0_i32_1 = arith.constant 0 : i32
    %c0_i32_2 = arith.constant 0 : i32
    %c0_i32_3 = arith.constant 0 : i32
    return %arg0, %c0_i32, %c0_i32_0, %c0_i32_1, %c0_i32_2 : i32, i32, i32, i32, i32
  }
  func.func @transform_7(%arg0: i32, %arg1: i32) -> (i32, i32, i32, i32) {
    %c0_i32 = arith.constant 0 : i32
    %c0_i32_0 = arith.constant 0 : i32
    %c0_i32_1 = arith.constant 0 : i32
    return %arg0, %arg1, %c0_i32, %c0_i32_0 : i32, i32, i32, i32
  }
}

</mosaic_0001>

<llo_original>
// kernel: depthwise_block_forward.1
$region0: #{depthwise_block_forward.1}
  #allocation0 [shape = 'u32[]', space=smem, size = 0x4, offset = 0x4, fixed_abs, tag = 'smem constant byte address 0x4 - core index']
  #allocation1 [shape = 'u32[144,128]{1,0:T(1,128)}', space=vmem, size = 0x12000, scoped, tag = 'internal scratch']
  %s0 = inlined_call_operand.vmem [shape: f32[3,3,1,8], index: 0, kind: input, shape index: {}]
  %s1 = inlined_call_operand.vmem [shape: f32[1,1,8], index: 1, kind: input, shape index: {}]
  %s2 = inlined_call_operand.vmem [shape: f32[1,1,8], index: 2, kind: input, shape index: {}]
  %s3 = inlined_call_operand.vmem [shape: f32[8,8], index: 3, kind: input, shape index: {}]
  %s4 = inlined_call_operand.vmem [shape: f32[1,8], index: 4, kind: input, shape index: {}]
  %s5 = inlined_call_operand.vmem [shape: f32[1,8], index: 5, kind: input, shape index: {}]
  %s6 = inlined_call_operand.vmem [shape: f32[2,18,1,18,8], index: 6, kind: input, shape index: {}]
  %s7 = inlined_call_operand.vmem [shape: f32[2,16,16,8], index: 7, kind: output, shape index: {}]
  %s8 = sld [smem:[#allocation0]]
  $region61: #{depthwise_block_forward.1} parent=0
    _
  %s10 = ssub.s32 1, %s8
  %s11 = scalar_select 0, %s10, %s8
  loop: start=0, step=1, limit=6
  $region2: #{depthwise_block_forward.1} parent=0 // loop_pre_header
    _
  $region3: #{depthwise_block_forward.1} parent=0 // loop_header
    %s13 = sphi 0, %s17
    %p14 = scmp.ge.s32.totalorder %s13, 6
    %s20 = sphi 0, %s32
    %s21 = sphi 0, %s28
    %s22 = sphi 0, %s20
    %s23 = sphi 0, %s21
    %s24 = sphi 0, %s22
    %s25 = sphi 0, %s23
    %s33 = sphi 0, %s33
    %s35 = sphi 0, %s33
    %s36 = sphi 0, %s35
    %s50 = sphi 0, %s36
    %s54 = sphi 0, %s54
    %s56 = sphi 0, %s54
    %s57 = sphi 0, %s56
    %s71 = sphi 0, %s57
    %s75 = sphi 0, %s75
    %s77 = sphi 0, %s75
    %s78 = sphi 0, %s77
    %s92 = sphi 0, %s78
    %s96 = sphi 0, %s96
    %s98 = sphi 0, %s96
    %s99 = sphi 0, %s98
    %s113 = sphi 0, %s99
    %s117 = sphi 0, %s117
    %s119 = sphi 0, %s117
    %s120 = sphi 0, %s119
    %s134 = sphi 0, %s120
    %s138 = sphi 0, %s138
    %s140 = sphi 0, %s138
    %s141 = sphi 0, %s140
    %s155 = sphi 0, %s141
    %s161 = sphi 0, %s163
    %s164 = sphi 0, %s161
    %s165 = sphi 0, %s164
    %s181 = sphi 0, %s165
    %s189 = sphi 0, %s191
    %s192 = sphi 0, %s189
    %s193 = sphi 0, %s192
    %s209 = sphi 0, %s193
  $region4: #{depthwise_block_forward.1} parent=0 // loop_header_branch
    %16 = sbr.rel (%p14) target = $region8
  $region5: #{depthwise_block_forward.1} parent=0 // loop_body
    %s18 = ssub.s32 %s13, 1
    %s19 = ssub.s32 %s13, 2
    %s26 = sadd.s32 1, %s21
    %p27 = scmp.ge.s32.totalorder %s26, 2
    %s28 = scalar_select %p27, 0, %s26
    %s29 = sadd.s32 1, %s20
    %s30 = scalar_select %p27, %s29, %s20
    %p31 = scmp.ge.s32.totalorder %s30, 2
    %s32 = scalar_select %p31, 0, %s30
    %s34 = sadd.s32 %s33, 1
    %p37 = scmp.eq.s32.totalorder %s13, 3
    %p38 = scmp.ne.s32.totalorder %s33, %s35
    %p39 = scmp.eq.s32.totalorder %s13, 0
    %p40 = por %p38, %p39
    %p41 = scmp.ne.s32.totalorder %s33, %s35
    %p42 = scmp.eq.s32.totalorder %s18, 3
    %p43 = por %p41, %p42
    %p44 = scmp.ne.s32.totalorder %s35, %s36
    %p45 = scmp.eq.s32.totalorder %s18, 0
    %p46 = por %p44, %p45
    %p47 = scmp.ne.s32.totalorder %s35, %s36
    %p48 = scmp.eq.s32.totalorder %s19, 3
    %p49 = por %p47, %p48
    %p51 = scmp.ne.s32.totalorder %s36, %s50
    %p52 = scmp.eq.s32.totalorder %s19, 0
    %p53 = por %p51, %p52
    %s55 = sadd.s32 %s54, 1
    %p58 = scmp.eq.s32.totalorder %s13, 3
    %p59 = scmp.ne.s32.totalorder %s54, %s56
    %p60 = scmp.eq.s32.totalorder %s13, 0
    %p61 = por %p59, %p60
    %p62 = scmp.ne.s32.totalorder %s54, %s56
    %p63 = scmp.eq.s32.totalorder %s18, 3
    %p64 = por %p62, %p63
    %p65 = scmp.ne.s32.totalorder %s56, %s57
    %p66 = scmp.eq.s32.totalorder %s18, 0
    %p67 = por %p65, %p66
    %p68 = scmp.ne.s32.totalorder %s56, %s57
    %p69 = scmp.eq.s32.totalorder %s19, 3
    %p70 = por %p68, %p69
    %p72 = scmp.ne.s32.totalorder %s57, %s71
    %p73 = scmp.eq.s32.totalorder %s19, 0
    %p74 = por %p72, %p73
    %s76 = sadd.s32 %s75, 1
    %p79 = scmp.eq.s32.totalorder %s13, 3
    %p80 = scmp.ne.s32.totalorder %s75, %s77
    %p81 = scmp.eq.s32.totalorder %s13, 0
    %p82 = por %p80, %p81
    %p83 = scmp.ne.s32.totalorder %s75, %s77
    %p84 = scmp.eq.s32.totalorder %s18, 3
    %p85 = por %p83, %p84
    %p86 = scmp.ne.s32.totalorder %s77, %s78
    %p87 = scmp.eq.s32.totalorder %s18, 0
    %p88 = por %p86, %p87
    %p89 = scmp.ne.s32.totalorder %s77, %s78
    %p90 = scmp.eq.s32.totalorder %s19, 3
    %p91 = por %p89, %p90
    %p93 = scmp.ne.s32.totalorder %s78, %s92
    %p94 = scmp.eq.s32.totalorder %s19, 0
    %p95 = por %p93, %p94
    %s97 = sadd.s32 %s96, 1
    %p100 = scmp.eq.s32.totalorder %s13, 3
    %p101 = scmp.ne.s32.totalorder %s96, %s98
    %p102 = scmp.eq.s32.totalorder %s13, 0
    %p103 = por %p101, %p102
    %p104 = scmp.ne.s32.totalorder %s96, %s98
    %p105 = scmp.eq.s32.totalorder %s18, 3
    %p106 = por %p104, %p105
    %p107 = scmp.ne.s32.totalorder %s98, %s99
    %p108 = scmp.eq.s32.totalorder %s18, 0
    %p109 = por %p107, %p108
    %p110 = scmp.ne.s32.totalorder %s98, %s99
    %p111 = scmp.eq.s32.totalorder %s19, 3
    %p112 = por %p110, %p111
    %p114 = scmp.ne.s32.totalorder %s99, %s113
    %p115 = scmp.eq.s32.totalorder %s19, 0
    %p116 = por %p114, %p115
    %s118 = sadd.s32 %s117, 1
    %p121 = scmp.eq.s32.totalorder %s13, 3
    %p122 = scmp.ne.s32.totalorder %s117, %s119
    %p123 = scmp.eq.s32.totalorder %s13, 0
    %p124 = por %p122, %p123
    %p125 = scmp.ne.s32.totalorder %s117, %s119
    %p126 = scmp.eq.s32.totalorder %s18, 3
    %p127 = por %p125, %p126
    %p128 = scmp.ne.s32.totalorder %s119, %s120
    %p129 = scmp.eq.s32.totalorder %s18, 0
    %p130 = por %p128, %p129
    %p131 = scmp.ne.s32.totalorder %s119, %s120
    %p132 = scmp.eq.s32.totalorder %s19, 3
    %p133 = por %p131, %p132
    %p135 = scmp.ne.s32.totalorder %s120, %s134
    %p136 = scmp.eq.s32.totalorder %s19, 0
    %p137 = por %p135, %p136
    %s139 = sadd.s32 %s138, 1
    %p142 = scmp.eq.s32.totalorder %s13, 3
    %p143 = scmp.ne.s32.totalorder %s138, %s140
    %p144 = scmp.eq.s32.totalorder %s13, 0
    %p145 = por %p143, %p144
    %p146 = scmp.ne.s32.totalorder %s138, %s140
    %p147 = scmp.eq.s32.totalorder %s18, 3
    %p148 = por %p146, %p147
    %p149 = scmp.ne.s32.totalorder %s140, %s141
    %p150 = scmp.eq.s32.totalorder %s18, 0
    %p151 = por %p149, %p150
    %p152 = scmp.ne.s32.totalorder %s140, %s141
    %p153 = scmp.eq.s32.totalorder %s19, 3
    %p154 = por %p152, %p153
    %p156 = scmp.ne.s32.totalorder %s141, %s155
    %p157 = scmp.eq.s32.totalorder %s19, 0
    %p158 = por %p156, %p157
    %s159 = ssub.s32 %s20, %s32
    %p160 = scmp.eq.s32.totalorder %s159, 0
    %s162 = sadd.s32 %s161, 1
    %s163 = scalar_select %p160, %s161, %s162
    %p166 = pneg %p160
    %p167 = scmp.eq.s32.totalorder %s13, 3
    %p168 = por %p166, %p167
    %p169 = scmp.ne.s32.totalorder %s161, %s164
    %p170 = scmp.eq.s32.totalorder %s13, 0
    %p171 = por %p169, %p170
    %p172 = scmp.ne.s32.totalorder %s161, %s164
    %p173 = scmp.eq.s32.totalorder %s18, 3
    %p174 = por %p172, %p173
    %p175 = scmp.ne.s32.totalorder %s164, %s165
    %p176 = scmp.eq.s32.totalorder %s18, 0
    %p177 = por %p175, %p176
    %p178 = scmp.ne.s32.totalorder %s164, %s165
    %p179 = scmp.eq.s32.totalorder %s19, 3
    %p180 = por %p178, %p179
    %p182 = scmp.ne.s32.totalorder %s165, %s181
    %p183 = scmp.eq.s32.totalorder %s19, 0
    %p184 = por %p182, %p183
    %s185 = ssub.s32 %s20, %s32
    %s186 = ssub.s32 %s21, %s28
    %s187 = sor.u32 %s185, %s186
    %p188 = scmp.eq.s32.totalorder %s187, 0
    %s190 = sadd.s32 %s189, 1
    %s191 = scalar_select %p188, %s189, %s190
    %p194 = pneg %p188
    %p195 = scmp.eq.s32.totalorder %s13, 3
    %p196 = por %p194, %p195
    %p197 = scmp.ne.s32.totalorder %s189, %s192
    %p198 = scmp.eq.s32.totalorder %s13, 0
    %p199 = por %p197, %p198
    %p200 = scmp.ne.s32.totalorder %s189, %s192
    %p201 = scmp.eq.s32.totalorder %s18, 3
    %p202 = por %p200, %p201
    %p203 = scmp.ne.s32.totalorder %s192, %s193
    %p204 = scmp.eq.s32.totalorder %s18, 0
    %p205 = por %p203, %p204
    %p206 = scmp.ne.s32.totalorder %s192, %s193
    %p207 = scmp.eq.s32.totalorder %s19, 3
    %p208 = por %p206, %p207
    %p210 = scmp.ne.s32.totalorder %s193, %s209
    %p211 = scmp.eq.s32.totalorder %s19, 0
    %p212 = por %p210, %p211
    %p213 = scmp.le.s32.totalorder 1, %s13
    %p214 = scmp.lt.s32.totalorder %s13, 5
    %p215 = pnand %p213, %p214
    %p216 = pneg %p215
    // Predicated region
    $region9: #{depthwise_block_forward.1} parent=5 // pred_check
      _
    $region10: #{depthwise_block_forward.1} parent=5 // pred_check_branch
      %218 = sbr.rel (%p215) target = $region12
    $region11: #{depthwise_block_forward.1} parent=5 // pred_region
      %s219 = ssub.s32 %s13, 1
      // Predicated region
      $region13: #{depthwise_block_forward.1} parent=11 // pred_check
        %p220 = pneg %p46
      $region14: #{depthwise_block_forward.1} parent=11 // pred_check_branch
        %222 = sbr.rel (%p220) target = $region16
      $region15: #{depthwise_block_forward.1} parent=11 // pred_region
        _
      $region16: #{depthwise_block_forward.1} parent=11 // pred_fallthru
        _
      // Predicated region
      $region17: #{depthwise_block_forward.1} parent=11 // pred_check
        %p223 = pneg %p67
      $region18: #{depthwise_block_forward.1} parent=11 // pred_check_branch
        %225 = sbr.rel (%p223) target = $region20
      $region19: #{depthwise_block_forward.1} parent=11 // pred_region
        _
      $region20: #{depthwise_block_forward.1} parent=11 // pred_fallthru
        _
      // Predicated region
      $region21: #{depthwise_block_forward.1} parent=11 // pred_check
        %p226 = pneg %p88
      $region22: #{depthwise_block_forward.1} parent=11 // pred_check_branch
        %228 = sbr.rel (%p226) target = $region24
      $region23: #{depthwise_block_forward.1} parent=11 // pred_region
        _
      $region24: #{depthwise_block_forward.1} parent=11 // pred_fallthru
        _
      // Predicated region
      $region25: #{depthwise_block_forward.1} parent=11 // pred_check
        %p229 = pneg %p109
      $region26: #{depthwise_block_forward.1} parent=11 // pred_check_branch
        %231 = sbr.rel (%p229) target = $region28
      $region27: #{depthwise_block_forward.1} parent=11 // pred_region
        _
      $region28: #{depthwise_block_forward.1} parent=11 // pred_fallthru
        _
      // Predicated region
      $region29: #{depthwise_block_forward.1} parent=11 // pred_check
        %p232 = pneg %p130
      $region30: #{depthwise_block_forward.1} parent=11 // pred_check_branch
        %234 = sbr.rel (%p232) target = $region32
      $region31: #{depthwise_block_forward.1} parent=11 // pred_region
        _
      $region32: #{depthwise_block_forward.1} parent=11 // pred_fallthru
        _
      // Predicated region
      $region33: #{depthwise_block_forward.1} parent=11 // pred_check
        %p235 = pneg %p151
      $region34: #{depthwise_block_forward.1} parent=11 // pred_check_branch
        %237 = sbr.rel (%p235) target = $region36
      $region35: #{depthwise_block_forward.1} parent=11 // pred_region
        _
      $region36: #{depthwise_block_forward.1} parent=11 // pred_fallthru
        _
    $region12: #{depthwise_block_forward.1} parent=5 // pred_fallthru
      _
    %p238 = scmp.lt.s32.totalorder %s13, 4
    // Predicated region
    $region37: #{depthwise_block_forward.1} parent=5 // pred_check
      %p239 = pneg %p238
    $region38: #{depthwise_block_forward.1} parent=5 // pred_check_branch
      %241 = sbr.rel (%p239) target = $region40
    $region39: #{depthwise_block_forward.1} parent=5 // pred_region
      // Predicated region
      $region41: #{depthwise_block_forward.1} parent=39 // pred_check
        %p242 = pneg %p171
      $region42: #{depthwise_block_forward.1} parent=39 // pred_check_branch
        %244 = sbr.rel (%p242) target = $region44
      $region43: #{depthwise_block_forward.1} parent=39 // pred_region
        %p245 = scmp.lt.s32.totalorder %s20, 1
        %s246 = scalar_select %p245, %s20, 1
        %s247 = smul.addr %s246, 54
        %s248 = smul.addr %s247, 8
        %s249 = scalar_lea.vmem %s6, %s248
      $region44: #{depthwise_block_forward.1} parent=39 // pred_fallthru
        _
    $region40: #{depthwise_block_forward.1} parent=5 // pred_fallthru
      _
    %p250 = scmp.le.s32.totalorder 1, %s13
    %p251 = scmp.lt.s32.totalorder %s13, 5
    %p252 = pnand %p250, %p251
    %p253 = pneg %p252
    // Predicated region
    $region45: #{depthwise_block_forward.1} parent=5 // pred_check
      _
    $region46: #{depthwise_block_forward.1} parent=5 // pred_check_branch
      %255 = sbr.rel (%p252) target = $region48
    $region47: #{depthwise_block_forward.1} parent=5 // pred_region
      %s256 = ssub.s32 %s13, 1
      %p257 = pneg %p46
      %p258 = pneg %p43
      %p259 = pneg %p67
      %p260 = pneg %p64
      %p261 = pneg %p88
      %p262 = pneg %p85
      %p263 = pneg %p109
      %p264 = pneg %p106
      %p265 = pneg %p130
      %p266 = pneg %p127
      %p267 = pneg %p151
      %p268 = pneg %p148
      %p269 = scmp.lt.s32.totalorder %s22, 1
      %s270 = scalar_select %p269, %s22, 1
      %s271 = smul.addr %s270, 54
      %s272 = smul.addr %s271, 8
      %s273 = scalar_lea.vmem %s6, %s272
      %p274 = pneg %p177
      %p275 = pneg %p174
      %p276 = pneg %p205
      %p277 = pneg %p202
      %s278 = smul.u32 8, %s23
      %p279 = scmp.lt.s32.totalorder %s22, 1
      %s280 = scalar_select %p279, %s22, 1
      %p281 = scmp.lt.s32.totalorder %s278, 15
      %s282 = scalar_select %p281, %s278, 15
      %s283 = smul.addr %s282, 2
      %s284 = smul.addr %s280, 32
      %s285 = sadd.s32 %s283, %s284
      %s286 = smul.addr %s285, 8
      %s287 = scalar_lea.vmem %s7, %s286
      %p288 = scmp.lt.s32.totalorder %s22, 1
      %s289 = scalar_select %p288, %s22, 1
      %s290 = smul.addr %s289, 54
      %s291 = smul.addr %s290, 8
      %s292 = scalar_lea.vmem %s6, %s291
      %s293 = smul.u32 8, %s23
      %p294 = scmp.lt.s32.totalorder %s22, 1
      %s295 = scalar_select %p294, %s22, 1
      %p296 = scmp.lt.s32.totalorder %s293, 15
      %s297 = scalar_select %p296, %s293, 15
      %s298 = smul.addr %s297, 2
      %s299 = smul.addr %s295, 32
      %s300 = sadd.s32 %s298, %s299
      %s301 = smul.addr %s300, 8
      %s302 = scalar_lea.vmem %s7, %s301
      %s303 = smul.u32 8, %s23
      %s304 = smul.u32 %s23, 8
      %s305 = smul.u32 %s304, 24
      %s306 = scalar_lea.vmem %s292, %s305
      %v307 = vld [vmem:[%s306] sm:$0xff]
      %v308 = vld [vmem:[%s306 + $0x8] sm:$0xff]
      %v309 = vld [vmem:[%s306 + $0x18] sm:$0xff]
      %v310 = vld [vmem:[%s306 + $0x20] sm:$0xff]
      %v311 = vld [vmem:[%s306 + $0x30] sm:$0xff]
      %v312 = vld [vmem:[%s306 + $0x38] sm:$0xff]
      %v313 = vld [vmem:[%s306 + $0x48] sm:$0xff]
      %v314 = vld [vmem:[%s306 + $0x50] sm:$0xff]
      %v315 = vld [vmem:[%s306 + $0x60] sm:$0xff]
      %v316 = vld [vmem:[%s306 + $0x68] sm:$0xff]
      %v317 = vld [vmem:[%s306 + $0x78] sm:$0xff]
      %v318 = vld [vmem:[%s306 + $0x80] sm:$0xff]
      %v319 = vld [vmem:[%s306 + $0x90] sm:$0xff]
      %v320 = vld [vmem:[%s306 + $0x98] sm:$0xff]
      %v321 = vld [vmem:[%s306 + $0xa8] sm:$0xff]
      %v322 = vld [vmem:[%s306 + $0xb0] sm:$0xff]
      %v323 = vld [vmem:[%s0] sm:$0x1]
      %v325 = vlaneseq
      %v326 = vshrl.u32 %v325, 7
      %v327 = vsub.s32 0, %v326
      %v328 = vrot.slane %v323, %v327
      %v330 = vmul.f32 %v328, %v307
      %v331 = vmul.f32 %v328, %v308
      %v332 = vmul.f32 %v328, %v309
      %v333 = vmul.f32 %v328, %v310
      %v334 = vmul.f32 %v328, %v311
      %v335 = vmul.f32 %v328, %v312
      %v336 = vmul.f32 %v328, %v313
      %v337 = vmul.f32 %v328, %v314
      %v338 = vmul.f32 %v328, %v315
      %v339 = vmul.f32 %v328, %v316
      %v340 = vmul.f32 %v328, %v317
      %v341 = vmul.f32 %v328, %v318
      %v342 = vmul.f32 %v328, %v319
      %v343 = vmul.f32 %v328, %v320
      %v344 = vmul.f32 %v328, %v321
      %v345 = vmul.f32 %v328, %v322
      %v346 = vadd.f32 %v330, 0.0
      %v347 = vadd.f32 %v331, 0.0
      %v348 = vadd.f32 %v332, 0.0
      %v349 = vadd.f32 %v333, 0.0
      %v350 = vadd.f32 %v334, 0.0
      %v351 = vadd.f32 %v335, 0.0
      %v352 = vadd.f32 %v336, 0.0
      %v353 = vadd.f32 %v337, 0.0
      %v354 = vadd.f32 %v338, 0.0
      %v355 = vadd.f32 %v339, 0.0
      %v356 = vadd.f32 %v340, 0.0
      %v357 = vadd.f32 %v341, 0.0
      %v358 = vadd.f32 %v342, 0.0
      %v359 = vadd.f32 %v343, 0.0
      %v360 = vadd.f32 %v344, 0.0
      %v361 = vadd.f32 %v345, 0.0
      %v362 = vld [vmem:[%s306 + $0x1] sm:$0xff]
      %v363 = vld [vmem:[%s306 + $0x9] sm:$0xff]
      %v364 = vld [vmem:[%s306 + $0x19] sm:$0xff]
      %v365 = vld [vmem:[%s306 + $0x21] sm:$0xff]
      %v366 = vld [vmem:[%s306 + $0x31] sm:$0xff]
      %v367 = vld [vmem:[%s306 + $0x39] sm:$0xff]
      %v368 = vld [vmem:[%s306 + $0x49] sm:$0xff]
      %v369 = vld [vmem:[%s306 + $0x51] sm:$0xff]
      %v370 = vld [vmem:[%s306 + $0x61] sm:$0xff]
      %v371 = vld [vmem:[%s306 + $0x69] sm:$0xff]
      %v372 = vld [vmem:[%s306 + $0x79] sm:$0xff]
      %v373 = vld [vmem:[%s306 + $0x81] sm:$0xff]
      %v374 = vld [vmem:[%s306 + $0x91] sm:$0xff]
      %v375 = vld [vmem:[%s306 + $0x99] sm:$0xff]
      %v376 = vld [vmem:[%s306 + $0xa9] sm:$0xff]
      %v377 = vld [vmem:[%s306 + $0xb1] sm:$0xff]
      %s378 = scalar_lea.vmem %s0, 1
      %v379 = vld [vmem:[%s378] sm:$0x1]
      %v381 = vlaneseq
      %v382 = vshrl.u32 %v381, 7
      %v383 = vsub.s32 0, %v382
      %v384 = vrot.slane %v379, %v383
      %v386 = vmul.f32 %v384, %v362
      %v387 = vmul.f32 %v384, %v363
      %v388 = vmul.f32 %v384, %v364
      %v389 = vmul.f32 %v384, %v365
      %v390 = vmul.f32 %v384, %v366
      %v391 = vmul.f32 %v384, %v367
      %v392 = vmul.f32 %v384, %v368
      %v393 = vmul.f32 %v384, %v369
      %v394 = vmul.f32 %v384, %v370
      %v395 = vmul.f32 %v384, %v371
      %v396 = vmul.f32 %v384, %v372
      %v397 = vmul.f32 %v384, %v373
      %v398 = vmul.f32 %v384, %v374
      %v399 = vmul.f32 %v384, %v375
      %v400 = vmul.f32 %v384, %v376
      %v401 = vmul.f32 %v384, %v377
      %v402 = vadd.f32 %v346, %v386
      %v403 = vadd.f32 %v347, %v387
      %v404 = vadd.f32 %v348, %v388
      %v405 = vadd.f32 %v349, %v389
      %v406 = vadd.f32 %v350, %v390
      %v407 = vadd.f32 %v351, %v391
      %v408 = vadd.f32 %v352, %v392
      %v409 = vadd.f32 %v353, %v393
      %v410 = vadd.f32 %v354, %v394
      %v411 = vadd.f32 %v355, %v395
      %v412 = vadd.f32 %v356, %v396
      %v413 = vadd.f32 %v357, %v397
      %v414 = vadd.f32 %v358, %v398
      %v415 = vadd.f32 %v359, %v399
      %v416 = vadd.f32 %v360, %v400
      %v417 = vadd.f32 %v361, %v401
      %v418 = vld [vmem:[%s306 + $0x2] sm:$0xff]
      %v419 = vld [vmem:[%s306 + $0xa] sm:$0xff]
      %v420 = vld [vmem:[%s306 + $0x1a] sm:$0xff]
      %v421 = vld [vmem:[%s306 + $0x22] sm:$0xff]
      %v422 = vld [vmem:[%s306 + $0x32] sm:$0xff]
      %v423 = vld [vmem:[%s306 + $0x3a] sm:$0xff]
      %v424 = vld [vmem:[%s306 + $0x4a] sm:$0xff]
      %v425 = vld [vmem:[%s306 + $0x52] sm:$0xff]
      %v426 = vld [vmem:[%s306 + $0x62] sm:$0xff]
      %v427 = vld [vmem:[%s306 + $0x6a] sm:$0xff]
      %v428 = vld [vmem:[%s306 + $0x7a] sm:$0xff]
      %v429 = vld [vmem:[%s306 + $0x82] sm:$0xff]
      %v430 = vld [vmem:[%s306 + $0x92] sm:$0xff]
      %v431 = vld [vmem:[%s306 + $0x9a] sm:$0xff]
      %v432 = vld [vmem:[%s306 + $0xaa] sm:$0xff]
      %v433 = vld [vmem:[%s306 + $0xb2] sm:$0xff]
      %s434 = scalar_lea.vmem %s0, 2
      %v435 = vld [vmem:[%s434] sm:$0x1]
      %v437 = vlaneseq
      %v438 = vshrl.u32 %v437, 7
      %v439 = vsub.s32 0, %v438
      %v440 = vrot.slane %v435, %v439
      %v442 = vmul.f32 %v440, %v418
      %v443 = vmul.f32 %v440, %v419
      %v444 = vmul.f32 %v440, %v420
      %v445 = vmul.f32 %v440, %v421
      %v446 = vmul.f32 %v440, %v422
      %v447 = vmul.f32 %v440, %v423
      %v448 = vmul.f32 %v440, %v424
      %v449 = vmul.f32 %v440, %v425
      %v450 = vmul.f32 %v440, %v426
      %v451 = vmul.f32 %v440, %v427
      %v452 = vmul.f32 %v440, %v428
      %v453 = vmul.f32 %v440, %v429
      %v454 = vmul.f32 %v440, %v430
      %v455 = vmul.f32 %v440, %v431
      %v456 = vmul.f32 %v440, %v432
      %v457 = vmul.f32 %v440, %v433
      %v458 = vadd.f32 %v402, %v442
      %v459 = vadd.f32 %v403, %v443
      %v460 = vadd.f32 %v404, %v444
      %v461 = vadd.f32 %v405, %v445
      %v462 = vadd.f32 %v406, %v446
      %v463 = vadd.f32 %v407, %v447
      %v464 = vadd.f32 %v408, %v448
      %v465 = vadd.f32 %v409, %v449
      %v466 = vadd.f32 %v410, %v450
      %v467 = vadd.f32 %v411, %v451
      %v468 = vadd.f32 %v412, %v452
      %v469 = vadd.f32 %v413, %v453
      %v470 = vadd.f32 %v414, %v454
      %v471 = vadd.f32 %v415, %v455
      %v472 = vadd.f32 %v416, %v456
      %v473 = vadd.f32 %v417, %v457
      %s474 = sadd.s32 %s304, 1
      %s475 = smul.u32 %s474, 24
      %s476 = scalar_lea.vmem %s292, %s475
      %v477 = vld [vmem:[%s476] sm:$0xff]
      %v478 = vld [vmem:[%s476 + $0x8] sm:$0xff]
      %v479 = vld [vmem:[%s476 + $0x18] sm:$0xff]
      %v480 = vld [vmem:[%s476 + $0x20] sm:$0xff]
      %v481 = vld [vmem:[%s476 + $0x30] sm:$0xff]
      %v482 = vld [vmem:[%s476 + $0x38] sm:$0xff]
      %v483 = vld [vmem:[%s476 + $0x48] sm:$0xff]
      %v484 = vld [vmem:[%s476 + $0x50] sm:$0xff]
      %v485 = vld [vmem:[%s476 + $0x60] sm:$0xff]
      %v486 = vld [vmem:[%s476 + $0x68] sm:$0xff]
      %v487 = vld [vmem:[%s476 + $0x78] sm:$0xff]
      %v488 = vld [vmem:[%s476 + $0x80] sm:$0xff]
      %v489 = vld [vmem:[%s476 + $0x90] sm:$0xff]
      %v490 = vld [vmem:[%s476 + $0x98] sm:$0xff]
      %v491 = vld [vmem:[%s476 + $0xa8] sm:$0xff]
      %v492 = vld [vmem:[%s476 + $0xb0] sm:$0xff]
      %s493 = scalar_lea.vmem %s0, 3
      %v494 = vld [vmem:[%s493] sm:$0x1]
      %v496 = vlaneseq
      %v497 = vshrl.u32 %v496, 7
      %v498 = vsub.s32 0, %v497
      %v499 = vrot.slane %v494, %v498
      %v501 = vmul.f32 %v499, %v477
      %v502 = vmul.f32 %v499, %v478
      %v503 = vmul.f32 %v499, %v479
      %v504 = vmul.f32 %v499, %v480
      %v505 = vmul.f32 %v499, %v481
      %v506 = vmul.f32 %v499, %v482
      %v507 = vmul.f32 %v499, %v483
      %v508 = vmul.f32 %v499, %v484
      %v509 = vmul.f32 %v499, %v485
      %v510 = vmul.f32 %v499, %v486
      %v511 = vmul.f32 %v499, %v487
      %v512 = vmul.f32 %v499, %v488
      %v513 = vmul.f32 %v499, %v489
      %v514 = vmul.f32 %v499, %v490
      %v515 = vmul.f32 %v499, %v491
      %v516 = vmul.f32 %v499, %v492
      %v517 = vadd.f32 %v458, %v501
      %v518 = vadd.f32 %v459, %v502
      %v519 = vadd.f32 %v460, %v503
      %v520 = vadd.f32 %v461, %v504
      %v521 = vadd.f32 %v462, %v505
      %v522 = vadd.f32 %v463, %v506
      %v523 = vadd.f32 %v464, %v507
      %v524 = vadd.f32 %v465, %v508
      %v525 = vadd.f32 %v466, %v509
      %v526 = vadd.f32 %v467, %v510
      %v527 = vadd.f32 %v468, %v511
      %v528 = vadd.f32 %v469, %v512
      %v529 = vadd.f32 %v470, %v513
      %v530 = vadd.f32 %v471, %v514
      %v531 = vadd.f32 %v472, %v515
      %v532 = vadd.f32 %v473, %v516
      %v533 = vld [vmem:[%s476 + $0x1] sm:$0xff]
      %v534 = vld [vmem:[%s476 + $0x9] sm:$0xff]
      %v535 = vld [vmem:[%s476 + $0x19] sm:$0xff]
      %v536 = vld [vmem:[%s476 + $0x21] sm:$0xff]
      %v537 = vld [vmem:[%s476 + $0x31] sm:$0xff]
      %v538 = vld [vmem:[%s476 + $0x39] sm:$0xff]
      %v539 = vld [vmem:[%s476 + $0x49] sm:$0xff]
      %v540 = vld [vmem:[%s476 + $0x51] sm:$0xff]
      %v541 = vld [vmem:[%s476 + $0x61] sm:$0xff]
      %v542 = vld [vmem:[%s476 + $0x69] sm:$0xff]
      %v543 = vld [vmem:[%s476 + $0x79] sm:$0xff]
      %v544 = vld [vmem:[%s476 + $0x81] sm:$0xff]
      %v545 = vld [vmem:[%s476 + $0x91] sm:$0xff]
      %v546 = vld [vmem:[%s476 + $0x99] sm:$0xff]
      %v547 = vld [vmem:[%s476 + $0xa9] sm:$0xff]
      %v548 = vld [vmem:[%s476 + $0xb1] sm:$0xff]
      %s549 = scalar_lea.vmem %s0, 4
      %v550 = vld [vmem:[%s549] sm:$0x1]
      %v552 = vlaneseq
      %v553 = vshrl.u32 %v552, 7
      %v554 = vsub.s32 0, %v553
      %v555 = vrot.slane %v550, %v554
      %v557 = vmul.f32 %v555, %v533
      %v558 = vmul.f32 %v555, %v534
      %v559 = vmul.f32 %v555, %v535
      %v560 = vmul.f32 %v555, %v536
      %v561 = vmul.f32 %v555, %v537
      %v562 = vmul.f32 %v555, %v538
      %v563 = vmul.f32 %v555, %v539
      %v564 = vmul.f32 %v555, %v540
      %v565 = vmul.f32 %v555, %v541
      %v566 = vmul.f32 %v555, %v542
      %v567 = vmul.f32 %v555, %v543
      %v568 = vmul.f32 %v555, %v544
      %v569 = vmul.f32 %v555, %v545
      %v570 = vmul.f32 %v555, %v546
      %v571 = vmul.f32 %v555, %v547
      %v572 = vmul.f32 %v555, %v548
      %v573 = vadd.f32 %v517, %v557
      %v574 = vadd.f32 %v518, %v558
      %v575 = vadd.f32 %v519, %v559
      %v576 = vadd.f32 %v520, %v560
      %v577 = vadd.f32 %v521, %v561
      %v578 = vadd.f32 %v522, %v562
      %v579 = vadd.f32 %v523, %v563
      %v580 = vadd.f32 %v524, %v564
      %v581 = vadd.f32 %v525, %v565
      %v582 = vadd.f32 %v526, %v566
      %v583 = vadd.f32 %v527, %v567
      %v584 = vadd.f32 %v528, %v568
      %v585 = vadd.f32 %v529, %v569
      %v586 = vadd.f32 %v530, %v570
      %v587 = vadd.f32 %v531, %v571
      %v588 = vadd.f32 %v532, %v572
      %v589 = vld [vmem:[%s476 + $0x2] sm:$0xff]
      %v590 = vld [vmem:[%s476 + $0xa] sm:$0xff]
      %v591 = vld [vmem:[%s476 + $0x1a] sm:$0xff]
      %v592 = vld [vmem:[%s476 + $0x22] sm:$0xff]
      %v593 = vld [vmem:[%s476 + $0x32] sm:$0xff]
      %v594 = vld [vmem:[%s476 + $0x3a] sm:$0xff]
      %v595 = vld [vmem:[%s476 + $0x4a] sm:$0xff]
      %v596 = vld [vmem:[%s476 + $0x52] sm:$0xff]
      %v597 = vld [vmem:[%s476 + $0x62] sm:$0xff]
      %v598 = vld [vmem:[%s476 + $0x6a] sm:$0xff]
      %v599 = vld [vmem:[%s476 + $0x7a] sm:$0xff]
      %v600 = vld [vmem:[%s476 + $0x82] sm:$0xff]
      %v601 = vld [vmem:[%s476 + $0x92] sm:$0xff]
      %v602 = vld [vmem:[%s476 + $0x9a] sm:$0xff]
      %v603 = vld [vmem:[%s476 + $0xaa] sm:$0xff]
      %v604 = vld [vmem:[%s476 + $0xb2] sm:$0xff]
      %s605 = scalar_lea.vmem %s0, 5
      %v606 = vld [vmem:[%s605] sm:$0x1]
      %v608 = vlaneseq
      %v609 = vshrl.u32 %v608, 7
      %v610 = vsub.s32 0, %v609
      %v611 = vrot.slane %v606, %v610
      %v613 = vmul.f32 %v611, %v589
      %v614 = vmul.f32 %v611, %v590
      %v615 = vmul.f32 %v611, %v591
      %v616 = vmul.f32 %v611, %v592
      %v617 = vmul.f32 %v611, %v593
      %v618 = vmul.f32 %v611, %v594
      %v619 = vmul.f32 %v611, %v595
      %v620 = vmul.f32 %v611, %v596
      %v621 = vmul.f32 %v611, %v597
      %v622 = vmul.f32 %v611, %v598
      %v623 = vmul.f32 %v611, %v599
      %v624 = vmul.f32 %v611, %v600
      %v625 = vmul.f32 %v611, %v601
      %v626 = vmul.f32 %v611, %v602
      %v627 = vmul.f32 %v611, %v603
      %v628 = vmul.f32 %v611, %v604
      %v629 = vadd.f32 %v573, %v613
      %v630 = vadd.f32 %v574, %v614
      %v631 = vadd.f32 %v575, %v615
      %v632 = vadd.f32 %v576, %v616
      %v633 = vadd.f32 %v577, %v617
      %v634 = vadd.f32 %v578, %v618
      %v635 = vadd.f32 %v579, %v619
      %v636 = vadd.f32 %v580, %v620
      %v637 = vadd.f32 %v581, %v621
      %v638 = vadd.f32 %v582, %v622
      %v639 = vadd.f32 %v583, %v623
      %v640 = vadd.f32 %v584, %v624
      %v641 = vadd.f32 %v585, %v625
      %v642 = vadd.f32 %v586, %v626
      %v643 = vadd.f32 %v587, %v627
      %v644 = vadd.f32 %v588, %v628
      %s645 = sadd.s32 %s304, 2
      %s646 = smul.u32 %s645, 24
      %s647 = scalar_lea.vmem %s292, %s646
      %v648 = vld [vmem:[%s647] sm:$0xff]
      %v649 = vld [vmem:[%s647 + $0x8] sm:$0xff]
      %v650 = vld [vmem:[%s647 + $0x18] sm:$0xff]
      %v651 = vld [vmem:[%s647 + $0x20] sm:$0xff]
      %v652 = vld [vmem:[%s647 + $0x30] sm:$0xff]
      %v653 = vld [vmem:[%s647 + $0x38] sm:$0xff]
      %v654 = vld [vmem:[%s647 + $0x48] sm:$0xff]
      %v655 = vld [vmem:[%s647 + $0x50] sm:$0xff]
      %v656 = vld [vmem:[%s647 + $0x60] sm:$0xff]
      %v657 = vld [vmem:[%s647 + $0x68] sm:$0xff]
      %v658 = vld [vmem:[%s647 + $0x78] sm:$0xff]
      %v659 = vld [vmem:[%s647 + $0x80] sm:$0xff]
      %v660 = vld [vmem:[%s647 + $0x90] sm:$0xff]
      %v661 = vld [vmem:[%s647 + $0x98] sm:$0xff]
      %v662 = vld [vmem:[%s647 + $0xa8] sm:$0xff]
      %v663 = vld [vmem:[%s647 + $0xb0] sm:$0xff]
      %s664 = scalar_lea.vmem %s0, 6
      %v665 = vld [vmem:[%s664] sm:$0x1]
      %v667 = vlaneseq
      %v668 = vshrl.u32 %v667, 7
      %v669 = vsub.s32 0, %v668
      %v670 = vrot.slane %v665, %v669
      %v672 = vmul.f32 %v670, %v648
      %v673 = vmul.f32 %v670, %v649
      %v674 = vmul.f32 %v670, %v650
      %v675 = vmul.f32 %v670, %v651
      %v676 = vmul.f32 %v670, %v652
      %v677 = vmul.f32 %v670, %v653
      %v678 = vmul.f32 %v670, %v654
      %v679 = vmul.f32 %v670, %v655
      %v680 = vmul.f32 %v670, %v656
      %v681 = vmul.f32 %v670, %v657
      %v682 = vmul.f32 %v670, %v658
      %v683 = vmul.f32 %v670, %v659
      %v684 = vmul.f32 %v670, %v660
      %v685 = vmul.f32 %v670, %v661
      %v686 = vmul.f32 %v670, %v662
      %v687 = vmul.f32 %v670, %v663
      %v688 = vadd.f32 %v629, %v672
      %v689 = vadd.f32 %v630, %v673
      %v690 = vadd.f32 %v631, %v674
      %v691 = vadd.f32 %v632, %v675
      %v692 = vadd.f32 %v633, %v676
      %v693 = vadd.f32 %v634, %v677
      %v694 = vadd.f32 %v635, %v678
      %v695 = vadd.f32 %v636, %v679
      %v696 = vadd.f32 %v637, %v680
      %v697 = vadd.f32 %v638, %v681
      %v698 = vadd.f32 %v639, %v682
      %v699 = vadd.f32 %v640, %v683
      %v700 = vadd.f32 %v641, %v684
      %v701 = vadd.f32 %v642, %v685
      %v702 = vadd.f32 %v643, %v686
      %v703 = vadd.f32 %v644, %v687
      %v704 = vld [vmem:[%s647 + $0x1] sm:$0xff]
      %v705 = vld [vmem:[%s647 + $0x9] sm:$0xff]
      %v706 = vld [vmem:[%s647 + $0x19] sm:$0xff]
      %v707 = vld [vmem:[%s647 + $0x21] sm:$0xff]
      %v708 = vld [vmem:[%s647 + $0x31] sm:$0xff]
      %v709 = vld [vmem:[%s647 + $0x39] sm:$0xff]
      %v710 = vld [vmem:[%s647 + $0x49] sm:$0xff]
      %v711 = vld [vmem:[%s647 + $0x51] sm:$0xff]
      %v712 = vld [vmem:[%s647 + $0x61] sm:$0xff]
      %v713 = vld [vmem:[%s647 + $0x69] sm:$0xff]
      %v714 = vld [vmem:[%s647 + $0x79] sm:$0xff]
      %v715 = vld [vmem:[%s647 + $0x81] sm:$0xff]
      %v716 = vld [vmem:[%s647 + $0x91] sm:$0xff]
      %v717 = vld [vmem:[%s647 + $0x99] sm:$0xff]
      %v718 = vld [vmem:[%s647 + $0xa9] sm:$0xff]
      %v719 = vld [vmem:[%s647 + $0xb1] sm:$0xff]
      %s720 = scalar_lea.vmem %s0, 7
      %v721 = vld [vmem:[%s720] sm:$0x1]
      %v723 = vlaneseq
      %v724 = vshrl.u32 %v723, 7
      %v725 = vsub.s32 0, %v724
      %v726 = vrot.slane %v721, %v725
      %v728 = vmul.f32 %v726, %v704
      %v729 = vmul.f32 %v726, %v705
      %v730 = vmul.f32 %v726, %v706
      %v731 = vmul.f32 %v726, %v707
      %v732 = vmul.f32 %v726, %v708
      %v733 = vmul.f32 %v726, %v709
      %v734 = vmul.f32 %v726, %v710
      %v735 = vmul.f32 %v726, %v711
      %v736 = vmul.f32 %v726, %v712
      %v737 = vmul.f32 %v726, %v713
      %v738 = vmul.f32 %v726, %v714
      %v739 = vmul.f32 %v726, %v715
      %v740 = vmul.f32 %v726, %v716
      %v741 = vmul.f32 %v726, %v717
      %v742 = vmul.f32 %v726, %v718
      %v743 = vmul.f32 %v726, %v719
      %v744 = vadd.f32 %v688, %v728
      %v745 = vadd.f32 %v689, %v729
      %v746 = vadd.f32 %v690, %v730
      %v747 = vadd.f32 %v691, %v731
      %v748 = vadd.f32 %v692, %v732
      %v749 = vadd.f32 %v693, %v733
      %v750 = vadd.f32 %v694, %v734
      %v751 = vadd.f32 %v695, %v735
      %v752 = vadd.f32 %v696, %v736
      %v753 = vadd.f32 %v697, %v737
      %v754 = vadd.f32 %v698, %v738
      %v755 = vadd.f32 %v699, %v739
      %v756 = vadd.f32 %v700, %v740
      %v757 = vadd.f32 %v701, %v741
      %v758 = vadd.f32 %v702, %v742
      %v759 = vadd.f32 %v703, %v743
      %v760 = vld [vmem:[%s647 + $0x2] sm:$0xff]
      %v761 = vld [vmem:[%s647 + $0xa] sm:$0xff]
      %v762 = vld [vmem:[%s647 + $0x1a] sm:$0xff]
      %v763 = vld [vmem:[%s647 + $0x22] sm:$0xff]
      %v764 = vld [vmem:[%s647 + $0x32] sm:$0xff]
      %v765 = vld [vmem:[%s647 + $0x3a] sm:$0xff]
      %v766 = vld [vmem:[%s647 + $0x4a] sm:$0xff]
      %v767 = vld [vmem:[%s647 + $0x52] sm:$0xff]
      %v768 = vld [vmem:[%s647 + $0x62] sm:$0xff]
      %v769 = vld [vmem:[%s647 + $0x6a] sm:$0xff]
      %v770 = vld [vmem:[%s647 + $0x7a] sm:$0xff]
      %v771 = vld [vmem:[%s647 + $0x82] sm:$0xff]
      %v772 = vld [vmem:[%s647 + $0x92] sm:$0xff]
      %v773 = vld [vmem:[%s647 + $0x9a] sm:$0xff]
      %v774 = vld [vmem:[%s647 + $0xaa] sm:$0xff]
      %v775 = vld [vmem:[%s647 + $0xb2] sm:$0xff]
      %s776 = scalar_lea.vmem %s0, 8
      %v777 = vld [vmem:[%s776] sm:$0x1]
      %v779 = vlaneseq
      %v780 = vshrl.u32 %v779, 7
      %v781 = vsub.s32 0, %v780
      %v782 = vrot.slane %v777, %v781
      %v784 = vmul.f32 %v782, %v760
      %v785 = vmul.f32 %v782, %v761
      %v786 = vmul.f32 %v782, %v762
      %v787 = vmul.f32 %v782, %v763
      %v788 = vmul.f32 %v782, %v764
      %v789 = vmul.f32 %v782, %v765
      %v790 = vmul.f32 %v782, %v766
      %v791 = vmul.f32 %v782, %v767
      %v792 = vmul.f32 %v782, %v768
      %v793 = vmul.f32 %v782, %v769
      %v794 = vmul.f32 %v782, %v770
      %v795 = vmul.f32 %v782, %v771
      %v796 = vmul.f32 %v782, %v772
      %v797 = vmul.f32 %v782, %v773
      %v798 = vmul.f32 %v782, %v774
      %v799 = vmul.f32 %v782, %v775
      %v800 = vadd.f32 %v744, %v784
      %v801 = vadd.f32 %v745, %v785
      %v802 = vadd.f32 %v746, %v786
      %v803 = vadd.f32 %v747, %v787
      %v804 = vadd.f32 %v748, %v788
      %v805 = vadd.f32 %v749, %v789
      %v806 = vadd.f32 %v750, %v790
      %v807 = vadd.f32 %v751, %v791
      %v808 = vadd.f32 %v752, %v792
      %v809 = vadd.f32 %v753, %v793
      %v810 = vadd.f32 %v754, %v794
      %v811 = vadd.f32 %v755, %v795
      %v812 = vadd.f32 %v756, %v796
      %v813 = vadd.f32 %v757, %v797
      %v814 = vadd.f32 %v758, %v798
      %v815 = vadd.f32 %v759, %v799
      %v816 = vld [vmem:[%s1] sm:$0x1]
      %v818 = vlaneseq
      %v819 = vshrl.u32 %v818, 7
      %v820 = vsub.s32 0, %v819
      %v821 = vrot.slane %v816, %v820
      %v823 = vadd.f32 %v800, %v821
      %v824 = vadd.f32 %v801, %v821
      %v825 = vadd.f32 %v802, %v821
      %v826 = vadd.f32 %v803, %v821
      %v827 = vadd.f32 %v804, %v821
      %v828 = vadd.f32 %v805, %v821
      %v829 = vadd.f32 %v806, %v821
      %v830 = vadd.f32 %v807, %v821
      %v831 = vadd.f32 %v808, %v821
      %v832 = vadd.f32 %v809, %v821
      %v833 = vadd.f32 %v810, %v821
      %v834 = vadd.f32 %v811, %v821
      %v835 = vadd.f32 %v812, %v821
      %v836 = vadd.f32 %v813, %v821
      %v837 = vadd.f32 %v814, %v821
      %v838 = vadd.f32 %v815, %v821
      %vm839 = vcmp.ge.f32.partialorder %v823, 0.0
      %vm840 = vcmp.ge.f32.partialorder %v824, 0.0
      %vm841 = vcmp.ge.f32.partialorder %v825, 0.0
      %vm842 = vcmp.ge.f32.partialorder %v826, 0.0
      %vm843 = vcmp.ge.f32.partialorder %v827, 0.0
      %vm844 = vcmp.ge.f32.partialorder %v828, 0.0
      %vm845 = vcmp.ge.f32.partialorder %v829, 0.0
      %vm846 = vcmp.ge.f32.partialorder %v830, 0.0
      %vm847 = vcmp.ge.f32.partialorder %v831, 0.0
      %vm848 = vcmp.ge.f32.partialorder %v832, 0.0
      %vm849 = vcmp.ge.f32.partialorder %v833, 0.0
      %vm850 = vcmp.ge.f32.partialorder %v834, 0.0
      %vm851 = vcmp.ge.f32.partialorder %v835, 0.0
      %vm852 = vcmp.ge.f32.partialorder %v836, 0.0
      %vm853 = vcmp.ge.f32.partialorder %v837, 0.0
      %vm854 = vcmp.ge.f32.partialorder %v838, 0.0
      %v855 = vld [vmem:[%s2] sm:$0x1]
      %v857 = vlaneseq
      %v858 = vshrl.u32 %v857, 7
      %v859 = vsub.s32 0, %v858
      %v860 = vrot.slane %v855, %v859
      %v862 = vmul.f32 %v860, %v823
      %v863 = vmul.f32 %v860, %v824
      %v864 = vmul.f32 %v860, %v825
      %v865 = vmul.f32 %v860, %v826
      %v866 = vmul.f32 %v860, %v827
      %v867 = vmul.f32 %v860, %v828
      %v868 = vmul.f32 %v860, %v829
      %v869 = vmul.f32 %v860, %v830
      %v870 = vmul.f32 %v860, %v831
      %v871 = vmul.f32 %v860, %v832
      %v872 = vmul.f32 %v860, %v833
      %v873 = vmul.f32 %v860, %v834
      %v874 = vmul.f32 %v860, %v835
      %v875 = vmul.f32 %v860, %v836
      %v876 = vmul.f32 %v860, %v837
      %v877 = vmul.f32 %v860, %v838
      %v878 = vsel %vm839, %v823, %v862
      %v879 = vsel %vm840, %v824, %v863
      %v880 = vsel %vm841, %v825, %v864
      %v881 = vsel %vm842, %v826, %v865
      %v882 = vsel %vm843, %v827, %v866
      %v883 = vsel %vm844, %v828, %v867
      %v884 = vsel %vm845, %v829, %v868
      %v885 = vsel %vm846, %v830, %v869
      %v886 = vsel %vm847, %v831, %v870
      %v887 = vsel %vm848, %v832, %v871
      %v888 = vsel %vm849, %v833, %v872
      %v889 = vsel %vm850, %v834, %v873
      %v890 = vsel %vm851, %v835, %v874
      %v891 = vsel %vm852, %v836, %v875
      %v892 = vsel %vm853, %v837, %v876
      %v893 = vsel %vm854, %v838, %v877
      %v894 = vld [vmem:[%s3] sm:$0xff]
      %v895 = vld [vmem:[%s4] sm:$0x1]
      %v897 = vlaneseq
      %v898 = vshrl.u32 %v897, 7
      %v899 = vsub.s32 0, %v898
      %v900 = vrot.slane %v895, %v899
      %vm902 = vcmask 64512
      %v904 = vsel %vm902, %v878, 0
      %v907 = vsel %vm902, %v879, 0
      %v910 = vsel %vm902, %v880, 0
      %v913 = vsel %vm902, %v881, 0
      %v916 = vsel %vm902, %v882, 0
      %v919 = vsel %vm902, %v883, 0
      %v922 = vsel %vm902, %v884, 0
      %v925 = vsel %vm902, %v885, 0
      %v928 = vsel %vm902, %v886, 0
      %v931 = vsel %vm902, %v887, 0
      %v934 = vsel %vm902, %v888, 0
      %v937 = vsel %vm902, %v889, 0
      %v940 = vsel %vm902, %v890, 0
      %v943 = vsel %vm902, %v891, 0
      %v946 = vsel %vm902, %v892, 0
      %v949 = vsel %vm902, %v893, 0
      %951 = vmatprep.subr.mxu0 0.0
      %952 = vmatpush1.msra.mxu0 0.0
      %953 = vmatprep.subr.mxu0 0.0
      %954 = vmatpush1.msra.mxu0 0.0
      %955 = vmatprep.subr.mxu0 0.0
      %956 = vmatpush1.msra.mxu0 0.0
      %957 = vmatprep.subr.mxu0 0.0
      %958 = vmatpush1.msra.mxu0 0.0
      %959 = vmatprep.subr.mxu0 0.0
      %960 = vmatpush1.msra.mxu0 0.0
      %961 = vmatprep.subr.mxu0 0.0
      %962 = vmatpush1.msra.mxu0 0.0
      %963 = vmatprep.subr.mxu0 0.0
      %964 = vmatpush1.msra.mxu0 0.0
      %965 = vmatprep.subr.mxu0 0.0
      %966 = vmatpush1.msra.mxu0 0.0
      %967 = vmatprep.subr.mxu0 0.0
      %968 = vmatpush1.msra.mxu0 0.0
      %969 = vmatprep.subr.mxu0 0.0
      %970 = vmatpush1.msra.mxu0 0.0
      %971 = vmatprep.subr.mxu0 0.0
      %972 = vmatpush1.msra.mxu0 0.0
      %973 = vmatprep.subr.mxu0 0.0
      %974 = vmatpush1.msra.mxu0 0.0
      %975 = vmatprep.subr.mxu0 0.0
      %976 = vmatpush1.msra.mxu0 0.0
      %977 = vmatprep.subr.mxu0 0.0
      %978 = vmatpush1.msra.mxu0 0.0
      %979 = vmatprep.subr.mxu0 0.0
      %980 = vmatpush1.msra.mxu0 0.0
      %981 = vmatprep.subr.mxu0 0.0
      %982 = vmatpush1.msra.mxu0 %v894
      %983 = vmatprep.subr.mxu0 0.0
      %984 = vmatpush2.msra.mxu0 0.0
      %985 = vmatprep.subr.mxu0 0.0
      %986 = vmatpush2.msra.mxu0 0.0
      %987 = vmatprep.subr.mxu0 0.0
      %988 = vmatpush2.msra.mxu0 0.0
      %989 = vmatprep.subr.mxu0 0.0
      %990 = vmatpush2.msra.mxu0 0.0
      %991 = vmatprep.subr.mxu0 0.0
      %992 = vmatpush2.msra.mxu0 0.0
      %993 = vmatprep.subr.mxu0 0.0
      %994 = vmatpush2.msra.mxu0 0.0
      %995 = vmatprep.subr.mxu0 0.0
      %996 = vmatpush2.msra.mxu0 0.0
      %997 = vmatprep.subr.mxu0 0.0
      %998 = vmatpush2.msra.mxu0 0.0
      %999 = vmatprep.subr.mxu0 0.0
      %1000 = vmatpush2.msra.mxu0 0.0
      %1001 = vmatprep.subr.mxu0 0.0
      %1002 = vmatpush2.msra.mxu0 0.0
      %1003 = vmatprep.subr.mxu0 0.0
      %1004 = vmatpush2.msra.mxu0 0.0
      %1005 = vmatprep.subr.mxu0 0.0
      %1006 = vmatpush2.msra.mxu0 0.0
      %1007 = vmatprep.subr.mxu0 0.0
      %1008 = vmatpush2.msra.mxu0 0.0
      %1009 = vmatprep.subr.mxu0 0.0
      %1010 = vmatpush2.msra.mxu0 0.0
      %1011 = vmatprep.subr.mxu0 0.0
      %1012 = vmatpush2.msra.mxu0 0.0
      %1013 = vmatprep.subr.mxu0 0.0
      %1014 = vmatpush2.msra.mxu0 0.0
      %1015 = vmatprep.mubr.f32.mxu0 0.0
      %1016 = vmatmul.mubr.f32.gmra.mxu0 %v904
      %v1017 = vpop.f32.mrf.mxu0
      %v1018 = vadd.f32 %v900, %v1017
      %v1019 = vpop.f32.mrf.mxu0
      %1020 = vmatprep.mubr.f32.mxu0 0.0
      %1021 = vmatmul.mubr.f32.gmra.mxu0 %v907
      %v1022 = vpop.f32.mrf.mxu0
      %v1023 = vadd.f32 %v900, %v1022
      %v1024 = vpop.f32.mrf.mxu0
      %1025 = vmatprep.mubr.f32.mxu0 0.0
      %1026 = vmatmul.mubr.f32.gmra.mxu0 %v910
      %v1027 = vpop.f32.mrf.mxu0
      %v1028 = vadd.f32 %v900, %v1027
      %v1029 = vpop.f32.mrf.mxu0
      %1030 = vmatprep.mubr.f32.mxu0 0.0
      %1031 = vmatmul.mubr.f32.gmra.mxu0 %v913
      %v1032 = vpop.f32.mrf.mxu0
      %v1033 = vadd.f32 %v900, %v1032
      %v1034 = vpop.f32.mrf.mxu0
      %1035 = vmatprep.mubr.f32.mxu0 0.0
      %1036 = vmatmul.mubr.f32.gmra.mxu0 %v916
      %v1037 = vpop.f32.mrf.mxu0
      %v1038 = vadd.f32 %v900, %v1037
      %v1039 = vpop.f32.mrf.mxu0
      %1040 = vmatprep.mubr.f32.mxu0 0.0
      %1041 = vmatmul.mubr.f32.gmra.mxu0 %v919
      %v1042 = vpop.f32.mrf.mxu0
      %v1043 = vadd.f32 %v900, %v1042
      %v1044 = vpop.f32.mrf.mxu0
      %1045 = vmatprep.mubr.f32.mxu0 0.0
      %1046 = vmatmul.mubr.f32.gmra.mxu0 %v922
      %v1047 = vpop.f32.mrf.mxu0
      %v1048 = vadd.f32 %v900, %v1047
      %v1049 = vpop.f32.mrf.mxu0
      %1050 = vmatprep.mubr.f32.mxu0 0.0
      %1051 = vmatmul.mubr.f32.gmra.mxu0 %v925
      %v1052 = vpop.f32.mrf.mxu0
      %v1053 = vadd.f32 %v900, %v1052
      %v1054 = vpop.f32.mrf.mxu0
      %1055 = vmatprep.mubr.f32.mxu0 0.0
      %1056 = vmatmul.mubr.f32.gmra.mxu0 %v928
      %v1057 = vpop.f32.mrf.mxu0
      %v1058 = vadd.f32 %v900, %v1057
      %v1059 = vpop.f32.mrf.mxu0
      %1060 = vmatprep.mubr.f32.mxu0 0.0
      %1061 = vmatmul.mubr.f32.gmra.mxu0 %v931
      %v1062 = vpop.f32.mrf.mxu0
      %v1063 = vadd.f32 %v900, %v1062
      %v1064 = vpop.f32.mrf.mxu0
      %1065 = vmatprep.mubr.f32.mxu0 0.0
      %1066 = vmatmul.mubr.f32.gmra.mxu0 %v934
      %v1067 = vpop.f32.mrf.mxu0
      %v1068 = vadd.f32 %v900, %v1067
      %v1069 = vpop.f32.mrf.mxu0
      %1070 = vmatprep.mubr.f32.mxu0 0.0
      %1071 = vmatmul.mubr.f32.gmra.mxu0 %v937
      %v1072 = vpop.f32.mrf.mxu0
      %v1073 = vadd.f32 %v900, %v1072
      %v1074 = vpop.f32.mrf.mxu0
      %1075 = vmatprep.mubr.f32.mxu0 0.0
      %1076 = vmatmul.mubr.f32.gmra.mxu0 %v940
      %v1077 = vpop.f32.mrf.mxu0
      %v1078 = vadd.f32 %v900, %v1077
      %v1079 = vpop.f32.mrf.mxu0
      %1080 = vmatprep.mubr.f32.mxu0 0.0
      %1081 = vmatmul.mubr.f32.gmra.mxu0 %v943
      %v1082 = vpop.f32.mrf.mxu0
      %v1083 = vadd.f32 %v900, %v1082
      %v1084 = vpop.f32.mrf.mxu0
      %1085 = vmatprep.mubr.f32.mxu0 0.0
      %1086 = vmatmul.mubr.f32.gmra.mxu0 %v946
      %v1087 = vpop.f32.mrf.mxu0
      %v1088 = vadd.f32 %v900, %v1087
      %v1089 = vpop.f32.mrf.mxu0
      %1090 = vmatprep.mubr.f32.mxu0 0.0
      %1091 = vmatmul.mubr.f32.gmra.mxu0 %v949
      %v1092 = vpop.f32.mrf.mxu0
      %v1093 = vadd.f32 %v900, %v1092
      %v1094 = vpop.f32.mrf.mxu0
      %1095 = vdwg.mxu0
      %vm1096 = vcmp.ge.f32.partialorder %v1018, 0.0
      %vm1097 = vcmp.ge.f32.partialorder %v1023, 0.0
      %vm1098 = vcmp.ge.f32.partialorder %v1028, 0.0
      %vm1099 = vcmp.ge.f32.partialorder %v1033, 0.0
      %vm1100 = vcmp.ge.f32.partialorder %v1038, 0.0
      %vm1101 = vcmp.ge.f32.partialorder %v1043, 0.0
      %vm1102 = vcmp.ge.f32.partialorder %v1048, 0.0
      %vm1103 = vcmp.ge.f32.partialorder %v1053, 0.0
      %vm1104 = vcmp.ge.f32.partialorder %v1058, 0.0
      %vm1105 = vcmp.ge.f32.partialorder %v1063, 0.0
      %vm1106 = vcmp.ge.f32.partialorder %v1068, 0.0
      %vm1107 = vcmp.ge.f32.partialorder %v1073, 0.0
      %vm1108 = vcmp.ge.f32.partialorder %v1078, 0.0
      %vm1109 = vcmp.ge.f32.partialorder %v1083, 0.0
      %vm1110 = vcmp.ge.f32.partialorder %v1088, 0.0
      %vm1111 = vcmp.ge.f32.partialorder %v1093, 0.0
      %v1112 = vld [vmem:[%s5] sm:$0x1]
      %v1114 = vlaneseq
      %v1115 = vshrl.u32 %v1114, 7
      %v1116 = vsub.s32 0, %v1115
      %v1117 = vrot.slane %v1112, %v1116
      %v1119 = vmul.f32 %v1117, %v1018
      %v1120 = vmul.f32 %v1117, %v1023
      %v1121 = vmul.f32 %v1117, %v1028
      %v1122 = vmul.f32 %v1117, %v1033
      %v1123 = vmul.f32 %v1117, %v1038
      %v1124 = vmul.f32 %v1117, %v1043
      %v1125 = vmul.f32 %v1117, %v1048
      %v1126 = vmul.f32 %v1117, %v1053
      %v1127 = vmul.f32 %v1117, %v1058
      %v1128 = vmul.f32 %v1117, %v1063
      %v1129 = vmul.f32 %v1117, %v1068
      %v1130 = vmul.f32 %v1117, %v1073
      %v1131 = vmul.f32 %v1117, %v1078
      %v1132 = vmul.f32 %v1117, %v1083
      %v1133 = vmul.f32 %v1117, %v1088
      %v1134 = vmul.f32 %v1117, %v1093
      %v1135 = vsel %vm1096, %v1018, %v1119
      %v1136 = vsel %vm1097, %v1023, %v1120
      %v1137 = vsel %vm1098, %v1028, %v1121
      %v1138 = vsel %vm1099, %v1033, %v1122
      %v1139 = vsel %vm1100, %v1038, %v1123
      %v1140 = vsel %vm1101, %v1043, %v1124
      %v1141 = vsel %vm1102, %v1048, %v1125
      %v1142 = vsel %vm1103, %v1053, %v1126
      %v1143 = vsel %vm1104, %v1058, %v1127
      %v1144 = vsel %vm1105, %v1063, %v1128
      %v1145 = vsel %vm1106, %v1068, %v1129
      %v1146 = vsel %vm1107, %v1073, %v1130
      %v1147 = vsel %vm1108, %v1078, %v1131
      %v1148 = vsel %vm1109, %v1083, %v1132
      %v1149 = vsel %vm1110, %v1088, %v1133
      %v1150 = vsel %vm1111, %v1093, %v1134
      %v1151 = vadd.f32 %v1135, %v533
      %v1152 = vadd.f32 %v1136, %v534
      %v1153 = vadd.f32 %v1137, %v535
      %v1154 = vadd.f32 %v1138, %v536
      %v1155 = vadd.f32 %v1139, %v537
      %v1156 = vadd.f32 %v1140, %v538
      %v1157 = vadd.f32 %v1141, %v539
      %v1158 = vadd.f32 %v1142, %v540
      %v1159 = vadd.f32 %v1143, %v541
      %v1160 = vadd.f32 %v1144, %v542
      %v1161 = vadd.f32 %v1145, %v543
      %v1162 = vadd.f32 %v1146, %v544
      %v1163 = vadd.f32 %v1147, %v545
      %v1164 = vadd.f32 %v1148, %v546
      %v1165 = vadd.f32 %v1149, %v547
      %v1166 = vadd.f32 %v1150, %v548
      %1167 = vst.msk [vmem:[%s302] sm:$0xff] %vm902, %v1151
      %1168 = vst.msk [vmem:[%s302 + $0x8] sm:$0xff] %vm902, %v1152
      %1169 = vst.msk [vmem:[%s302 + $0x10] sm:$0xff] %vm902, %v1153
      %1170 = vst.msk [vmem:[%s302 + $0x18] sm:$0xff] %vm902, %v1154
      %1171 = vst.msk [vmem:[%s302 + $0x20] sm:$0xff] %vm902, %v1155
      %1172 = vst.msk [vmem:[%s302 + $0x28] sm:$0xff] %vm902, %v1156
      %1173 = vst.msk [vmem:[%s302 + $0x30] sm:$0xff] %vm902, %v1157
      %1174 = vst.msk [vmem:[%s302 + $0x38] sm:$0xff] %vm902, %v1158
      %1175 = vst.msk [vmem:[%s302 + $0x40] sm:$0xff] %vm902, %v1159
      %1176 = vst.msk [vmem:[%s302 + $0x48] sm:$0xff] %vm902, %v1160
      %1177 = vst.msk [vmem:[%s302 + $0x50] sm:$0xff] %vm902, %v1161
      %1178 = vst.msk [vmem:[%s302 + $0x58] sm:$0xff] %vm902, %v1162
      %1179 = vst.msk [vmem:[%s302 + $0x60] sm:$0xff] %vm902, %v1163
      %1180 = vst.msk [vmem:[%s302 + $0x68] sm:$0xff] %vm902, %v1164
      %1181 = vst.msk [vmem:[%s302 + $0x70] sm:$0xff] %vm902, %v1165
      %1182 = vst.msk [vmem:[%s302 + $0x78] sm:$0xff] %vm902, %v1166
      %s1183 = smul.u32 8, %s23
      %p1184 = scmp.lt.s32.totalorder %s22, 1
      %s1185 = scalar_select %p1184, %s22, 1
      %p1186 = scmp.lt.s32.totalorder %s1183, 15
      %s1187 = scalar_select %p1186, %s1183, 15
      %s1188 = smul.addr %s1187, 2
      %s1189 = smul.addr %s1185, 32
      %s1190 = sadd.s32 %s1188, %s1189
      %s1191 = smul.addr %s1190, 8
      %s1192 = scalar_lea.vmem %s7, %s1191
      // Predicated region
      $region49: #{depthwise_block_forward.1} parent=47 // pred_check
        %p1193 = pneg %p202
      $region50: #{depthwise_block_forward.1} parent=47 // pred_check_branch
        %1195 = sbr.rel (%p1193) target = $region52
      $region51: #{depthwise_block_forward.1} parent=47 // pred_region
        %s1196 = smul.u32 8, %s23
      $region52: #{depthwise_block_forward.1} parent=47 // pred_fallthru
        _
    $region48: #{depthwise_block_forward.1} parent=5 // pred_fallthru
      _
    %p1197 = scmp.le.s32.totalorder 2, %s13
    // Predicated region
    $region53: #{depthwise_block_forward.1} parent=5 // pred_check
      %p1198 = pneg %p1197
    $region54: #{depthwise_block_forward.1} parent=5 // pred_check_branch
      %1200 = sbr.rel (%p1198) target = $region56
    $region55: #{depthwise_block_forward.1} parent=5 // pred_region
      %s1201 = ssub.s32 %s13, 2
      // Predicated region
      $region57: #{depthwise_block_forward.1} parent=55 // pred_check
        %p1202 = pneg %p208
      $region58: #{depthwise_block_forward.1} parent=55 // pred_check_branch
        %1204 = sbr.rel (%p1202) target = $region60
      $region59: #{depthwise_block_forward.1} parent=55 // pred_region
        %s1205 = smul.u32 8, %s25
        %p1206 = scmp.lt.s32.totalorder %s24, 1
        %s1207 = scalar_select %p1206, %s24, 1
        %p1208 = scmp.lt.s32.totalorder %s1205, 15
        %s1209 = scalar_select %p1208, %s1205, 15
        %s1210 = smul.addr %s1209, 2
        %s1211 = smul.addr %s1207, 32
        %s1212 = sadd.s32 %s1210, %s1211
        %s1213 = smul.addr %s1212, 8
        %s1214 = scalar_lea.vmem %s7, %s1213
      $region60: #{depthwise_block_forward.1} parent=55 // pred_fallthru
        _
    $region56: #{depthwise_block_forward.1} parent=5 // pred_fallthru
      _
  $region6: #{depthwise_block_forward.1} parent=0 // loop_footer
    %s17 = sadd.s32 1, %s13
  $region7: #{depthwise_block_forward.1} parent=0 // loop_footer_branch
    %12 = sbr.rel target = $region3
  $region8: #{depthwise_block_forward.1} parent=0 // loop_exit
    _

</llo_original>
